<compile_context>
chip_gen: v6e
topology: v6e:2x2x1
jax: 0.10.0
libtpu: 0.0.40
codegen_flags: <defaults>
</compile_context>

<pallas_src>
import math

import jax
import jax.numpy as jnp
import numpy as np
from jax.experimental import pallas as pl
from jax.experimental.pallas import tpu as pltpu

AGGREGATORS = ("mean", "max", "min", "std")
SCALERS = ("identity", "amplification", "attenuation")
EPS = 1e-5


def stower_kernel(x_ref, adj_ref, scal_ref, w_mean_ref, w_max_ref, w_min_ref,
                  w_std_ref, bias_ref, o_ref):
    """One grid step = G (batch*time) slices in slab layout.

    x_ref    : (N, G*F_in)   nodes on sublanes, (slice, feature) on lanes
    adj_ref  : (N, N)
    scal_ref : (N, 4)        [1/deg, log(deg+1)/avg_d, avg_d/(log(deg+1)+eps), deg>0]
    w_*_ref  : (P*F_in, 3*P*F_out)   kron(I_P, Theta_{scaler,agg}) blocks
    bias_ref : (1, P*F_out)
    o_ref    : (N, G*F_out)
    """
    x = x_ref[...]                                   # (N, GFin)
    adj = adj_ref[...]                               # (N, N)
    n_nodes = x.shape[0]

    inv_deg = scal_ref[:, 0:1]                       # (N, 1)
    amp = scal_ref[:, 1:2]                           # (N, 1)
    att = scal_ref[:, 2:3]                           # (N, 1)
    has_nbr = scal_ref[:, 3:4] > 0.5                 # (N, 1) bool

    # --- aggregation: one large MXU contraction per pass (adj shared over slices) ---
    s1 = jnp.dot(adj, x, preferred_element_type=jnp.float32)        # weighted sum
    s2 = jnp.dot(adj, x * x, preferred_element_type=jnp.float32)    # weighted sum of sq
    agg_mean = s1 * inv_deg
    var = jnp.maximum(s2 * inv_deg - agg_mean * agg_mean, 0.0)
    agg_std = jnp.sqrt(var + EPS)

    # --- masked max / min without the (N, N, F) broadcast: running accumulators ---
    agg_max = jnp.full(x.shape, -jnp.inf, x.dtype)
    agg_min = jnp.full(x.shape, jnp.inf, x.dtype)
    # TODO(synk): for very large N, switch this static unroll to a chunked fori_loop.
    for k in range(n_nodes):
        xk = x[k:k + 1, :]                           # (1, GFin) candidate row
        col = adj[:, k:k + 1] > 0.0                  # (N, 1) "k is my neighbour"
        agg_max = jnp.where(col, jnp.maximum(agg_max, xk), agg_max)
        agg_min = jnp.where(col, jnp.minimum(agg_min, xk), agg_min)
    # zero-degree nodes: clamp instead of propagating +/-inf into the projection
    agg_max = jnp.where(has_nbr, agg_max, 0.0)
    agg_min = jnp.where(has_nbr, agg_min, 0.0)

    # --- factored projection + degree scalers ---
    w_mean = w_mean_ref[...]
    w_max = w_max_ref[...]
    w_min = w_min_ref[...]
    w_std = w_std_ref[...]
    bias_row = bias_ref[...]                         # (1, P*Fout)

    pfin = w_mean.shape[0]                           # P * F_in
    pfo = w_mean.shape[1] // 3                       # P * F_out
    n_chunks = x.shape[1] // pfin                    # = G // P (static)

    for c in range(n_chunks):
        sl = slice(c * pfin, (c + 1) * pfin)
        p = jnp.dot(agg_mean[:, sl], w_mean, preferred_element_type=jnp.float32)
        p = p + jnp.dot(agg_max[:, sl], w_max, preferred_element_type=jnp.float32)
        p = p + jnp.dot(agg_min[:, sl], w_min, preferred_element_type=jnp.float32)
        p = p + jnp.dot(agg_std[:, sl], w_std, preferred_element_type=jnp.float32)
        out_c = (p[:, :pfo]
                 + amp * p[:, pfo:2 * pfo]
                 + att * p[:, 2 * pfo:]
                 + bias_row)
        o_ref[:, c * pfo:(c + 1) * pfo] = out_c
    # TODO(synk): F.dropout skipped (inference path, training=False => identity).


def _lcm(a, b):
    return a * b // math.gcd(a, b)


def _choose_tiles(bt, fin, fout, max_block_slices=256, max_proj_slices=64):
    """Pick G (slices per grid step) and P (slices per projection chunk).

    Blocks that do not span the full array must keep the lane dim a multiple of
    128, so G (and P, when P < G) must be multiples of `align`.
    """
    align = _lcm(128 // math.gcd(128, fin), 128 // math.gcd(128, fout))

    if bt <= max_block_slices:
        g = bt
    else:
        g = bt  # fallback: one big block
        cand = (max_block_slices // align) * align
        while cand >= align:
            if bt % cand == 0:
                g = cand
                break
            cand -= align

    if g <= max_proj_slices:
        p = g
    else:
        p = g  # fallback: replicate weights over the whole block
        cand = (max_proj_slices // align) * align
        while cand >= align:
            if g % cand == 0:
                p = cand
                break
            cand -= align
    return g, p


def stower_forward(X, adj, theta, bias, avg_d):
    """X: (B, F_in, T, N), adj: (N, N) -> (B, F_out, T, N), matching STower.forward."""
    B, Fin, T, N = X.shape
    ASF, Fout = theta.shape
    A, S = len(AGGREGATORS), len(SCALERS)
    assert ASF == A * S * Fin
    BT = B * T

    G, P = _choose_tiles(BT, Fin, Fout)
    assert BT % G == 0 and G % P == 0

    adj = adj.astype(jnp.float32)
    theta = theta.astype(jnp.float32)
    bias = bias.astype(jnp.float32)

    # ---- adj-derived invariants, computed once (hoisted out of the grid loop) ----
    deg = jnp.sum(adj, axis=1)                               # (N,)
    inv_deg = 1.0 / jnp.maximum(deg, EPS)
    logd = jnp.log(deg + 1.0)
    amp_scale = logd / avg_d
    att_scale = avg_d / (logd + EPS)
    has_nbr = (deg > 0.0).astype(jnp.float32)
    scal = jnp.stack([inv_deg, amp_scale, att_scale, has_nbr], axis=1)   # (N, 4)

    # ---- factored projection weights: Theta split per (scaler, aggregator) and
    #      replicated block-diagonally over P slices so the per-slice feature
    #      contraction is one clean 2-D MXU matmul (no in-kernel relayouts). ----
    AF = A * Fin
    eye_p = jnp.eye(P, dtype=jnp.float32)
    Ws = []
    for a in range(A):
        blocks = [jnp.kron(eye_p, theta[s * AF + a * Fin: s * AF + (a + 1) * Fin, :])
                  for s in range(S)]
        Ws.append(jnp.concatenate(blocks, axis=1))           # (P*Fin, S*P*Fout)
    bias_row = jnp.tile(bias, P).reshape(1, P * Fout)        # (1, P*Fout)

    # ---- slab layout: nodes on sublanes, (slice, feature) flattened on lanes ----
    x_slab = jnp.transpose(X.astype(jnp.float32), (3, 0, 2, 1)).reshape(N, BT * Fin)

    grid = (BT // G,)
    out_slab = pl.pallas_call(
        stower_kernel,
        out_shape=jax.ShapeDtypeStruct((N, BT * Fout), jnp.float32),
        grid=grid,
        in_specs=[
            pl.BlockSpec((N, G * Fin), lambda i: (0, i)),
            pl.BlockSpec((N, N), lambda i: (0, 0)),
            pl.BlockSpec((N, 4), lambda i: (0, 0)),
            pl.BlockSpec((P * Fin, S * P * Fout), lambda i: (0, 0)),
            pl.BlockSpec((P * Fin, S * P * Fout), lambda i: (0, 0)),
            pl.BlockSpec((P * Fin, S * P * Fout), lambda i: (0, 0)),
            pl.BlockSpec((P * Fin, S * P * Fout), lambda i: (0, 0)),
            pl.BlockSpec((1, P * Fout), lambda i: (0, 0)),
        ],
        out_specs=pl.BlockSpec((N, G * Fout), lambda i: (0, i)),
        compiler_params=pltpu.CompilerParams(dimension_semantics=("parallel",)),
    )(x_slab, adj, scal, Ws[0], Ws[1], Ws[2], Ws[3], bias_row)

    out = out_slab.reshape(N, B, T, Fout)                    # (N, B, T, F_out)
    return jnp.transpose(out, (1, 3, 2, 0))                  # (B, F_out, T, N)


def stower_ref(X, adj, theta, bias, avg_d):
    """Pure NumPy reference mirroring the PyTorch forward (training=False)."""
    I = np.transpose(X, (0, 2, 3, 1))                        # (B, T, N, F_in)
    deg = adj.sum(1, keepdims=True)                          # (N, 1)
    deg_safe = np.maximum(deg, EPS)

    mean = np.einsum("nk,btkf->btnf", adj, I) / deg_safe[None, None]
    msq = np.einsum("nk,btkf->btnf", adj, I * I) / deg_safe[None, None]
    std = np.sqrt(np.maximum(msq - mean * mean, 0.0) + EPS)

    mask = adj > 0.0
    xb = I[:, :, None, :, :]                                 # (B, T, 1, N, F)
    mx = np.where(mask[None, None, :, :, None], xb, -np.inf).max(3)
    mn = np.where(mask[None, None, :, :, None], xb, np.inf).min(3)

    m = np.concatenate([mean, mx, mn, std], axis=-1)
    logd = np.log(deg + 1.0)
    amp = m * (logd / avg_d)[None, None]
    att = m * (avg_d / (logd + EPS))[None, None]
    m = np.concatenate([m, amp, att], axis=-1)

    out = np.einsum("btji,io->btjo", m, theta) + bias
    return np.transpose(out, (0, 3, 1, 2))


if __name__ == "__main__":
    B, Fin, T, N, Fout = 2, 4, 8, 16, 8
    key = jax.random.PRNGKey(0)
    k1, k2, k3, k4 = jax.random.split(key, 4)

    X = jax.random.normal(k1, (B, Fin, T, N), dtype=jnp.float32)
    adj = (jax.random.uniform(k2, (N, N)) > 0.6).astype(jnp.float32)
    adj = jnp.maximum(adj, jnp.eye(N, dtype=jnp.float32))  # every node has deg > 0

    # Deterministic parameter init mirroring reset_parameters (uniform(-stdv, stdv)).
    AS = len(AGGREGATORS) * len(SCALERS)
    stdv = 1.0 / math.sqrt(Fout)
    theta = jax.random.uniform(k3, (AS * Fin, Fout), jnp.float32, -stdv, stdv)
    bias = jax.random.uniform(k4, (Fout,), jnp.float32, -stdv, stdv)

    avg_d = float(jnp.mean(jnp.log(adj.sum(1) + 1.0)))

    out = stower_forward(X, adj, theta, bias, avg_d)
    out = jax.block_until_ready(out)

    ref = stower_ref(np.asarray(X), np.asarray(adj), np.asarray(theta),
                     np.asarray(bias), avg_d)
    assert out.shape == (B, Fout, T, N)
    np.testing.assert_allclose(np.asarray(out), ref, rtol=2e-4, atol=2e-4)
    print("KERNEL_OK")
</pallas_src>

<mosaic_0001>
module attributes {stable_mosaic.version = 11 : i64} {
  func.func @stower_kernel(%arg0: i32, %arg1: memref<16x64xf32, #tpu.memory_space<vmem>>, %arg2: memref<16x16xf32, #tpu.memory_space<vmem>>, %arg3: memref<16x4xf32, #tpu.memory_space<vmem>>, %arg4: memref<64x384xf32, #tpu.memory_space<vmem>>, %arg5: memref<64x384xf32, #tpu.memory_space<vmem>>, %arg6: memref<64x384xf32, #tpu.memory_space<vmem>>, %arg7: memref<64x384xf32, #tpu.memory_space<vmem>>, %arg8: memref<1x128xf32, #tpu.memory_space<vmem>>, %arg9: memref<16x128xf32, #tpu.memory_space<vmem>>) attributes {dimension_semantics = [#tpu.dimension_semantics<parallel>], iteration_bounds = array<i64: 1>, scalar_prefetch = 0 : i64, scratch_operands = 0 : i64, tpu.core_type = #tpu.core_type<tc>, window_params = [{transform_indices = @transform_0, window_bounds = array<i64: 16, 64>}, {pipeline_mode = #tpu.pipeline_mode<synchronous>, transform_indices = @transform_1, window_bounds = array<i64: 16, 16>}, {pipeline_mode = #tpu.pipeline_mode<synchronous>, transform_indices = @transform_2, window_bounds = array<i64: 16, 4>}, {pipeline_mode = #tpu.pipeline_mode<synchronous>, transform_indices = @transform_3, window_bounds = array<i64: 64, 384>}, {pipeline_mode = #tpu.pipeline_mode<synchronous>, transform_indices = @transform_4, window_bounds = array<i64: 64, 384>}, {pipeline_mode = #tpu.pipeline_mode<synchronous>, transform_indices = @transform_5, window_bounds = array<i64: 64, 384>}, {pipeline_mode = #tpu.pipeline_mode<synchronous>, transform_indices = @transform_6, window_bounds = array<i64: 64, 384>}, {pipeline_mode = #tpu.pipeline_mode<synchronous>, transform_indices = @transform_7, window_bounds = array<i64: 1, 128>}, {transform_indices = @transform_8, window_bounds = array<i64: 16, 128>}]} {
    %c0 = arith.constant 0 : index
    %c0_0 = arith.constant 0 : index
    %0 = vector.load %arg1[%c0, %c0_0] : memref<16x64xf32, #tpu.memory_space<vmem>>, vector<16x64xf32>
    %c0_1 = arith.constant 0 : index
    %c0_2 = arith.constant 0 : index
    %1 = vector.load %arg2[%c0_1, %c0_2] : memref<16x16xf32, #tpu.memory_space<vmem>>, vector<16x16xf32>
    %c0_3 = arith.constant 0 : index
    %c0_4 = arith.constant 0 : index
    %2 = vector.load %arg3[%c0_3, %c0_4] : memref<16x4xf32, #tpu.memory_space<vmem>>, vector<16x1xf32>
    %c0_5 = arith.constant 0 : index
    %c1 = arith.constant 1 : index
    %3 = vector.load %arg3[%c0_5, %c1] : memref<16x4xf32, #tpu.memory_space<vmem>>, vector<16x1xf32>
    %c0_6 = arith.constant 0 : index
    %c2 = arith.constant 2 : index
    %4 = vector.load %arg3[%c0_6, %c2] : memref<16x4xf32, #tpu.memory_space<vmem>>, vector<16x1xf32>
    %c0_7 = arith.constant 0 : index
    %c3 = arith.constant 3 : index
    %5 = vector.load %arg3[%c0_7, %c3] : memref<16x4xf32, #tpu.memory_space<vmem>>, vector<16x1xf32>
    %cst = arith.constant 5.000000e-01 : f32
    %6 = vector.broadcast %cst : f32 to vector<16x1xf32>
    %7 = arith.cmpf ogt, %5, %6 : vector<16x1xf32>
    %cst_8 = arith.constant dense<0.000000e+00> : vector<16x64xf32>
    %8 = tpu.matmul %1, %0, %cst_8 {dimension_numbers = #tpu.dot_dimension_numbers<[1], [0], [0], [1], [0, 0, 1, 1], [], []>} : vector<16x16xf32>, vector<16x64xf32>, vector<16x64xf32> -> vector<16x64xf32>
    %9 = arith.mulf %0, %0 : vector<16x64xf32>
    %cst_9 = arith.constant dense<0.000000e+00> : vector<16x64xf32>
    %10 = tpu.matmul %1, %9, %cst_9 {dimension_numbers = #tpu.dot_dimension_numbers<[1], [0], [0], [1], [0, 0, 1, 1], [], []>} : vector<16x16xf32>, vector<16x64xf32>, vector<16x64xf32> -> vector<16x64xf32>
    %11 = vector.broadcast %2 : vector<16x1xf32> to vector<16x64xf32>
    %12 = arith.mulf %8, %11 : vector<16x64xf32>
    %13 = vector.broadcast %2 : vector<16x1xf32> to vector<16x64xf32>
    %14 = arith.mulf %10, %13 : vector<16x64xf32>
    %15 = arith.mulf %12, %12 : vector<16x64xf32>
    %16 = arith.subf %14, %15 : vector<16x64xf32>
    %cst_10 = arith.constant 0.000000e+00 : f32
    %17 = vector.broadcast %cst_10 : f32 to vector<16x64xf32>
    %18 = arith.maximumf %16, %17 : vector<16x64xf32>
    %cst_11 = arith.constant 9.99999974E-6 : f32
    %19 = vector.broadcast %cst_11 : f32 to vector<16x64xf32>
    %20 = arith.addf %18, %19 : vector<16x64xf32>
    %21 = math.sqrt %20 : vector<16x64xf32>
    %cst_12 = arith.constant 0xFF800000 : f32
    %22 = vector.broadcast %cst_12 : f32 to vector<16x64xf32>
    %cst_13 = arith.constant 0x7F800000 : f32
    %23 = vector.broadcast %cst_13 : f32 to vector<16x64xf32>
    %24 = vector.extract_strided_slice %0 {offsets = [0, 0], sizes = [1, 64], strides = [1, 1]} : vector<16x64xf32> to vector<1x64xf32>
    %25 = vector.extract_strided_slice %1 {offsets = [0, 0], sizes = [16, 1], strides = [1, 1]} : vector<16x16xf32> to vector<16x1xf32>
    %cst_14 = arith.constant 0.000000e+00 : f32
    %26 = vector.broadcast %cst_14 : f32 to vector<16x1xf32>
    %27 = arith.cmpf ogt, %25, %26 : vector<16x1xf32>
    %28 = vector.broadcast %24 : vector<1x64xf32> to vector<16x64xf32>
    %29 = arith.maximumf %22, %28 : vector<16x64xf32>
    %30 = vector.shape_cast %27 : vector<16x1xi1> to vector<16x1xi1>
    %31 = vector.broadcast %30 : vector<16x1xi1> to vector<16x64xi1>
    %32 = arith.select %31, %29, %22 : vector<16x64xi1>, vector<16x64xf32>
    %33 = vector.broadcast %24 : vector<1x64xf32> to vector<16x64xf32>
    %34 = arith.minimumf %23, %33 : vector<16x64xf32>
    %35 = vector.shape_cast %27 : vector<16x1xi1> to vector<16x1xi1>
    %36 = vector.broadcast %35 : vector<16x1xi1> to vector<16x64xi1>
    %37 = arith.select %36, %34, %23 : vector<16x64xi1>, vector<16x64xf32>
    %38 = vector.extract_strided_slice %0 {offsets = [1, 0], sizes = [1, 64], strides = [1, 1]} : vector<16x64xf32> to vector<1x64xf32>
    %39 = vector.extract_strided_slice %1 {offsets = [0, 1], sizes = [16, 1], strides = [1, 1]} : vector<16x16xf32> to vector<16x1xf32>
    %cst_15 = arith.constant 0.000000e+00 : f32
    %40 = vector.broadcast %cst_15 : f32 to vector<16x1xf32>
    %41 = arith.cmpf ogt, %39, %40 : vector<16x1xf32>
    %42 = vector.broadcast %38 : vector<1x64xf32> to vector<16x64xf32>
    %43 = arith.maximumf %32, %42 : vector<16x64xf32>
    %44 = vector.shape_cast %41 : vector<16x1xi1> to vector<16x1xi1>
    %45 = vector.broadcast %44 : vector<16x1xi1> to vector<16x64xi1>
    %46 = arith.select %45, %43, %32 : vector<16x64xi1>, vector<16x64xf32>
    %47 = vector.broadcast %38 : vector<1x64xf32> to vector<16x64xf32>
    %48 = arith.minimumf %37, %47 : vector<16x64xf32>
    %49 = vector.shape_cast %41 : vector<16x1xi1> to vector<16x1xi1>
    %50 = vector.broadcast %49 : vector<16x1xi1> to vector<16x64xi1>
    %51 = arith.select %50, %48, %37 : vector<16x64xi1>, vector<16x64xf32>
    %52 = vector.extract_strided_slice %0 {offsets = [2, 0], sizes = [1, 64], strides = [1, 1]} : vector<16x64xf32> to vector<1x64xf32>
    %53 = vector.extract_strided_slice %1 {offsets = [0, 2], sizes = [16, 1], strides = [1, 1]} : vector<16x16xf32> to vector<16x1xf32>
    %cst_16 = arith.constant 0.000000e+00 : f32
    %54 = vector.broadcast %cst_16 : f32 to vector<16x1xf32>
    %55 = arith.cmpf ogt, %53, %54 : vector<16x1xf32>
    %56 = vector.broadcast %52 : vector<1x64xf32> to vector<16x64xf32>
    %57 = arith.maximumf %46, %56 : vector<16x64xf32>
    %58 = vector.shape_cast %55 : vector<16x1xi1> to vector<16x1xi1>
    %59 = vector.broadcast %58 : vector<16x1xi1> to vector<16x64xi1>
    %60 = arith.select %59, %57, %46 : vector<16x64xi1>, vector<16x64xf32>
    %61 = vector.broadcast %52 : vector<1x64xf32> to vector<16x64xf32>
    %62 = arith.minimumf %51, %61 : vector<16x64xf32>
    %63 = vector.shape_cast %55 : vector<16x1xi1> to vector<16x1xi1>
    %64 = vector.broadcast %63 : vector<16x1xi1> to vector<16x64xi1>
    %65 = arith.select %64, %62, %51 : vector<16x64xi1>, vector<16x64xf32>
    %66 = vector.extract_strided_slice %0 {offsets = [3, 0], sizes = [1, 64], strides = [1, 1]} : vector<16x64xf32> to vector<1x64xf32>
    %67 = vector.extract_strided_slice %1 {offsets = [0, 3], sizes = [16, 1], strides = [1, 1]} : vector<16x16xf32> to vector<16x1xf32>
    %cst_17 = arith.constant 0.000000e+00 : f32
    %68 = vector.broadcast %cst_17 : f32 to vector<16x1xf32>
    %69 = arith.cmpf ogt, %67, %68 : vector<16x1xf32>
    %70 = vector.broadcast %66 : vector<1x64xf32> to vector<16x64xf32>
    %71 = arith.maximumf %60, %70 : vector<16x64xf32>
    %72 = vector.shape_cast %69 : vector<16x1xi1> to vector<16x1xi1>
    %73 = vector.broadcast %72 : vector<16x1xi1> to vector<16x64xi1>
    %74 = arith.select %73, %71, %60 : vector<16x64xi1>, vector<16x64xf32>
    %75 = vector.broadcast %66 : vector<1x64xf32> to vector<16x64xf32>
    %76 = arith.minimumf %65, %75 : vector<16x64xf32>
    %77 = vector.shape_cast %69 : vector<16x1xi1> to vector<16x1xi1>
    %78 = vector.broadcast %77 : vector<16x1xi1> to vector<16x64xi1>
    %79 = arith.select %78, %76, %65 : vector<16x64xi1>, vector<16x64xf32>
    %80 = vector.extract_strided_slice %0 {offsets = [4, 0], sizes = [1, 64], strides = [1, 1]} : vector<16x64xf32> to vector<1x64xf32>
    %81 = vector.extract_strided_slice %1 {offsets = [0, 4], sizes = [16, 1], strides = [1, 1]} : vector<16x16xf32> to vector<16x1xf32>
    %cst_18 = arith.constant 0.000000e+00 : f32
    %82 = vector.broadcast %cst_18 : f32 to vector<16x1xf32>
    %83 = arith.cmpf ogt, %81, %82 : vector<16x1xf32>
    %84 = vector.broadcast %80 : vector<1x64xf32> to vector<16x64xf32>
    %85 = arith.maximumf %74, %84 : vector<16x64xf32>
    %86 = vector.shape_cast %83 : vector<16x1xi1> to vector<16x1xi1>
    %87 = vector.broadcast %86 : vector<16x1xi1> to vector<16x64xi1>
    %88 = arith.select %87, %85, %74 : vector<16x64xi1>, vector<16x64xf32>
    %89 = vector.broadcast %80 : vector<1x64xf32> to vector<16x64xf32>
    %90 = arith.minimumf %79, %89 : vector<16x64xf32>
    %91 = vector.shape_cast %83 : vector<16x1xi1> to vector<16x1xi1>
    %92 = vector.broadcast %91 : vector<16x1xi1> to vector<16x64xi1>
    %93 = arith.select %92, %90, %79 : vector<16x64xi1>, vector<16x64xf32>
    %94 = vector.extract_strided_slice %0 {offsets = [5, 0], sizes = [1, 64], strides = [1, 1]} : vector<16x64xf32> to vector<1x64xf32>
    %95 = vector.extract_strided_slice %1 {offsets = [0, 5], sizes = [16, 1], strides = [1, 1]} : vector<16x16xf32> to vector<16x1xf32>
    %cst_19 = arith.constant 0.000000e+00 : f32
    %96 = vector.broadcast %cst_19 : f32 to vector<16x1xf32>
    %97 = arith.cmpf ogt, %95, %96 : vector<16x1xf32>
    %98 = vector.broadcast %94 : vector<1x64xf32> to vector<16x64xf32>
    %99 = arith.maximumf %88, %98 : vector<16x64xf32>
    %100 = vector.shape_cast %97 : vector<16x1xi1> to vector<16x1xi1>
    %101 = vector.broadcast %100 : vector<16x1xi1> to vector<16x64xi1>
    %102 = arith.select %101, %99, %88 : vector<16x64xi1>, vector<16x64xf32>
    %103 = vector.broadcast %94 : vector<1x64xf32> to vector<16x64xf32>
    %104 = arith.minimumf %93, %103 : vector<16x64xf32>
    %105 = vector.shape_cast %97 : vector<16x1xi1> to vector<16x1xi1>
    %106 = vector.broadcast %105 : vector<16x1xi1> to vector<16x64xi1>
    %107 = arith.select %106, %104, %93 : vector<16x64xi1>, vector<16x64xf32>
    %108 = vector.extract_strided_slice %0 {offsets = [6, 0], sizes = [1, 64], strides = [1, 1]} : vector<16x64xf32> to vector<1x64xf32>
    %109 = vector.extract_strided_slice %1 {offsets = [0, 6], sizes = [16, 1], strides = [1, 1]} : vector<16x16xf32> to vector<16x1xf32>
    %cst_20 = arith.constant 0.000000e+00 : f32
    %110 = vector.broadcast %cst_20 : f32 to vector<16x1xf32>
    %111 = arith.cmpf ogt, %109, %110 : vector<16x1xf32>
    %112 = vector.broadcast %108 : vector<1x64xf32> to vector<16x64xf32>
    %113 = arith.maximumf %102, %112 : vector<16x64xf32>
    %114 = vector.shape_cast %111 : vector<16x1xi1> to vector<16x1xi1>
    %115 = vector.broadcast %114 : vector<16x1xi1> to vector<16x64xi1>
    %116 = arith.select %115, %113, %102 : vector<16x64xi1>, vector<16x64xf32>
    %117 = vector.broadcast %108 : vector<1x64xf32> to vector<16x64xf32>
    %118 = arith.minimumf %107, %117 : vector<16x64xf32>
    %119 = vector.shape_cast %111 : vector<16x1xi1> to vector<16x1xi1>
    %120 = vector.broadcast %119 : vector<16x1xi1> to vector<16x64xi1>
    %121 = arith.select %120, %118, %107 : vector<16x64xi1>, vector<16x64xf32>
    %122 = vector.extract_strided_slice %0 {offsets = [7, 0], sizes = [1, 64], strides = [1, 1]} : vector<16x64xf32> to vector<1x64xf32>
    %123 = vector.extract_strided_slice %1 {offsets = [0, 7], sizes = [16, 1], strides = [1, 1]} : vector<16x16xf32> to vector<16x1xf32>
    %cst_21 = arith.constant 0.000000e+00 : f32
    %124 = vector.broadcast %cst_21 : f32 to vector<16x1xf32>
    %125 = arith.cmpf ogt, %123, %124 : vector<16x1xf32>
    %126 = vector.broadcast %122 : vector<1x64xf32> to vector<16x64xf32>
    %127 = arith.maximumf %116, %126 : vector<16x64xf32>
    %128 = vector.shape_cast %125 : vector<16x1xi1> to vector<16x1xi1>
    %129 = vector.broadcast %128 : vector<16x1xi1> to vector<16x64xi1>
    %130 = arith.select %129, %127, %116 : vector<16x64xi1>, vector<16x64xf32>
    %131 = vector.broadcast %122 : vector<1x64xf32> to vector<16x64xf32>
    %132 = arith.minimumf %121, %131 : vector<16x64xf32>
    %133 = vector.shape_cast %125 : vector<16x1xi1> to vector<16x1xi1>
    %134 = vector.broadcast %133 : vector<16x1xi1> to vector<16x64xi1>
    %135 = arith.select %134, %132, %121 : vector<16x64xi1>, vector<16x64xf32>
    %136 = vector.extract_strided_slice %0 {offsets = [8, 0], sizes = [1, 64], strides = [1, 1]} : vector<16x64xf32> to vector<1x64xf32>
    %137 = vector.extract_strided_slice %1 {offsets = [0, 8], sizes = [16, 1], strides = [1, 1]} : vector<16x16xf32> to vector<16x1xf32>
    %cst_22 = arith.constant 0.000000e+00 : f32
    %138 = vector.broadcast %cst_22 : f32 to vector<16x1xf32>
    %139 = arith.cmpf ogt, %137, %138 : vector<16x1xf32>
    %140 = vector.broadcast %136 : vector<1x64xf32> to vector<16x64xf32>
    %141 = arith.maximumf %130, %140 : vector<16x64xf32>
    %142 = vector.shape_cast %139 : vector<16x1xi1> to vector<16x1xi1>
    %143 = vector.broadcast %142 : vector<16x1xi1> to vector<16x64xi1>
    %144 = arith.select %143, %141, %130 : vector<16x64xi1>, vector<16x64xf32>
    %145 = vector.broadcast %136 : vector<1x64xf32> to vector<16x64xf32>
    %146 = arith.minimumf %135, %145 : vector<16x64xf32>
    %147 = vector.shape_cast %139 : vector<16x1xi1> to vector<16x1xi1>
    %148 = vector.broadcast %147 : vector<16x1xi1> to vector<16x64xi1>
    %149 = arith.select %148, %146, %135 : vector<16x64xi1>, vector<16x64xf32>
    %150 = vector.extract_strided_slice %0 {offsets = [9, 0], sizes = [1, 64], strides = [1, 1]} : vector<16x64xf32> to vector<1x64xf32>
    %151 = vector.extract_strided_slice %1 {offsets = [0, 9], sizes = [16, 1], strides = [1, 1]} : vector<16x16xf32> to vector<16x1xf32>
    %cst_23 = arith.constant 0.000000e+00 : f32
    %152 = vector.broadcast %cst_23 : f32 to vector<16x1xf32>
    %153 = arith.cmpf ogt, %151, %152 : vector<16x1xf32>
    %154 = vector.broadcast %150 : vector<1x64xf32> to vector<16x64xf32>
    %155 = arith.maximumf %144, %154 : vector<16x64xf32>
    %156 = vector.shape_cast %153 : vector<16x1xi1> to vector<16x1xi1>
    %157 = vector.broadcast %156 : vector<16x1xi1> to vector<16x64xi1>
    %158 = arith.select %157, %155, %144 : vector<16x64xi1>, vector<16x64xf32>
    %159 = vector.broadcast %150 : vector<1x64xf32> to vector<16x64xf32>
    %160 = arith.minimumf %149, %159 : vector<16x64xf32>
    %161 = vector.shape_cast %153 : vector<16x1xi1> to vector<16x1xi1>
    %162 = vector.broadcast %161 : vector<16x1xi1> to vector<16x64xi1>
    %163 = arith.select %162, %160, %149 : vector<16x64xi1>, vector<16x64xf32>
    %164 = vector.extract_strided_slice %0 {offsets = [10, 0], sizes = [1, 64], strides = [1, 1]} : vector<16x64xf32> to vector<1x64xf32>
    %165 = vector.extract_strided_slice %1 {offsets = [0, 10], sizes = [16, 1], strides = [1, 1]} : vector<16x16xf32> to vector<16x1xf32>
    %cst_24 = arith.constant 0.000000e+00 : f32
    %166 = vector.broadcast %cst_24 : f32 to vector<16x1xf32>
    %167 = arith.cmpf ogt, %165, %166 : vector<16x1xf32>
    %168 = vector.broadcast %164 : vector<1x64xf32> to vector<16x64xf32>
    %169 = arith.maximumf %158, %168 : vector<16x64xf32>
    %170 = vector.shape_cast %167 : vector<16x1xi1> to vector<16x1xi1>
    %171 = vector.broadcast %170 : vector<16x1xi1> to vector<16x64xi1>
    %172 = arith.select %171, %169, %158 : vector<16x64xi1>, vector<16x64xf32>
    %173 = vector.broadcast %164 : vector<1x64xf32> to vector<16x64xf32>
    %174 = arith.minimumf %163, %173 : vector<16x64xf32>
    %175 = vector.shape_cast %167 : vector<16x1xi1> to vector<16x1xi1>
    %176 = vector.broadcast %175 : vector<16x1xi1> to vector<16x64xi1>
    %177 = arith.select %176, %174, %163 : vector<16x64xi1>, vector<16x64xf32>
    %178 = vector.extract_strided_slice %0 {offsets = [11, 0], sizes = [1, 64], strides = [1, 1]} : vector<16x64xf32> to vector<1x64xf32>
    %179 = vector.extract_strided_slice %1 {offsets = [0, 11], sizes = [16, 1], strides = [1, 1]} : vector<16x16xf32> to vector<16x1xf32>
    %cst_25 = arith.constant 0.000000e+00 : f32
    %180 = vector.broadcast %cst_25 : f32 to vector<16x1xf32>
    %181 = arith.cmpf ogt, %179, %180 : vector<16x1xf32>
    %182 = vector.broadcast %178 : vector<1x64xf32> to vector<16x64xf32>
    %183 = arith.maximumf %172, %182 : vector<16x64xf32>
    %184 = vector.shape_cast %181 : vector<16x1xi1> to vector<16x1xi1>
    %185 = vector.broadcast %184 : vector<16x1xi1> to vector<16x64xi1>
    %186 = arith.select %185, %183, %172 : vector<16x64xi1>, vector<16x64xf32>
    %187 = vector.broadcast %178 : vector<1x64xf32> to vector<16x64xf32>
    %188 = arith.minimumf %177, %187 : vector<16x64xf32>
    %189 = vector.shape_cast %181 : vector<16x1xi1> to vector<16x1xi1>
    %190 = vector.broadcast %189 : vector<16x1xi1> to vector<16x64xi1>
    %191 = arith.select %190, %188, %177 : vector<16x64xi1>, vector<16x64xf32>
    %192 = vector.extract_strided_slice %0 {offsets = [12, 0], sizes = [1, 64], strides = [1, 1]} : vector<16x64xf32> to vector<1x64xf32>
    %193 = vector.extract_strided_slice %1 {offsets = [0, 12], sizes = [16, 1], strides = [1, 1]} : vector<16x16xf32> to vector<16x1xf32>
    %cst_26 = arith.constant 0.000000e+00 : f32
    %194 = vector.broadcast %cst_26 : f32 to vector<16x1xf32>
    %195 = arith.cmpf ogt, %193, %194 : vector<16x1xf32>
    %196 = vector.broadcast %192 : vector<1x64xf32> to vector<16x64xf32>
    %197 = arith.maximumf %186, %196 : vector<16x64xf32>
    %198 = vector.shape_cast %195 : vector<16x1xi1> to vector<16x1xi1>
    %199 = vector.broadcast %198 : vector<16x1xi1> to vector<16x64xi1>
    %200 = arith.select %199, %197, %186 : vector<16x64xi1>, vector<16x64xf32>
    %201 = vector.broadcast %192 : vector<1x64xf32> to vector<16x64xf32>
    %202 = arith.minimumf %191, %201 : vector<16x64xf32>
    %203 = vector.shape_cast %195 : vector<16x1xi1> to vector<16x1xi1>
    %204 = vector.broadcast %203 : vector<16x1xi1> to vector<16x64xi1>
    %205 = arith.select %204, %202, %191 : vector<16x64xi1>, vector<16x64xf32>
    %206 = vector.extract_strided_slice %0 {offsets = [13, 0], sizes = [1, 64], strides = [1, 1]} : vector<16x64xf32> to vector<1x64xf32>
    %207 = vector.extract_strided_slice %1 {offsets = [0, 13], sizes = [16, 1], strides = [1, 1]} : vector<16x16xf32> to vector<16x1xf32>
    %cst_27 = arith.constant 0.000000e+00 : f32
    %208 = vector.broadcast %cst_27 : f32 to vector<16x1xf32>
    %209 = arith.cmpf ogt, %207, %208 : vector<16x1xf32>
    %210 = vector.broadcast %206 : vector<1x64xf32> to vector<16x64xf32>
    %211 = arith.maximumf %200, %210 : vector<16x64xf32>
    %212 = vector.shape_cast %209 : vector<16x1xi1> to vector<16x1xi1>
    %213 = vector.broadcast %212 : vector<16x1xi1> to vector<16x64xi1>
    %214 = arith.select %213, %211, %200 : vector<16x64xi1>, vector<16x64xf32>
    %215 = vector.broadcast %206 : vector<1x64xf32> to vector<16x64xf32>
    %216 = arith.minimumf %205, %215 : vector<16x64xf32>
    %217 = vector.shape_cast %209 : vector<16x1xi1> to vector<16x1xi1>
    %218 = vector.broadcast %217 : vector<16x1xi1> to vector<16x64xi1>
    %219 = arith.select %218, %216, %205 : vector<16x64xi1>, vector<16x64xf32>
    %220 = vector.extract_strided_slice %0 {offsets = [14, 0], sizes = [1, 64], strides = [1, 1]} : vector<16x64xf32> to vector<1x64xf32>
    %221 = vector.extract_strided_slice %1 {offsets = [0, 14], sizes = [16, 1], strides = [1, 1]} : vector<16x16xf32> to vector<16x1xf32>
    %cst_28 = arith.constant 0.000000e+00 : f32
    %222 = vector.broadcast %cst_28 : f32 to vector<16x1xf32>
    %223 = arith.cmpf ogt, %221, %222 : vector<16x1xf32>
    %224 = vector.broadcast %220 : vector<1x64xf32> to vector<16x64xf32>
    %225 = arith.maximumf %214, %224 : vector<16x64xf32>
    %226 = vector.shape_cast %223 : vector<16x1xi1> to vector<16x1xi1>
    %227 = vector.broadcast %226 : vector<16x1xi1> to vector<16x64xi1>
    %228 = arith.select %227, %225, %214 : vector<16x64xi1>, vector<16x64xf32>
    %229 = vector.broadcast %220 : vector<1x64xf32> to vector<16x64xf32>
    %230 = arith.minimumf %219, %229 : vector<16x64xf32>
    %231 = vector.shape_cast %223 : vector<16x1xi1> to vector<16x1xi1>
    %232 = vector.broadcast %231 : vector<16x1xi1> to vector<16x64xi1>
    %233 = arith.select %232, %230, %219 : vector<16x64xi1>, vector<16x64xf32>
    %234 = vector.extract_strided_slice %0 {offsets = [15, 0], sizes = [1, 64], strides = [1, 1]} : vector<16x64xf32> to vector<1x64xf32>
    %235 = vector.extract_strided_slice %1 {offsets = [0, 15], sizes = [16, 1], strides = [1, 1]} : vector<16x16xf32> to vector<16x1xf32>
    %cst_29 = arith.constant 0.000000e+00 : f32
    %236 = vector.broadcast %cst_29 : f32 to vector<16x1xf32>
    %237 = arith.cmpf ogt, %235, %236 : vector<16x1xf32>
    %238 = vector.broadcast %234 : vector<1x64xf32> to vector<16x64xf32>
    %239 = arith.maximumf %228, %238 : vector<16x64xf32>
    %240 = vector.shape_cast %237 : vector<16x1xi1> to vector<16x1xi1>
    %241 = vector.broadcast %240 : vector<16x1xi1> to vector<16x64xi1>
    %242 = arith.select %241, %239, %228 : vector<16x64xi1>, vector<16x64xf32>
    %243 = vector.broadcast %234 : vector<1x64xf32> to vector<16x64xf32>
    %244 = arith.minimumf %233, %243 : vector<16x64xf32>
    %245 = vector.shape_cast %237 : vector<16x1xi1> to vector<16x1xi1>
    %246 = vector.broadcast %245 : vector<16x1xi1> to vector<16x64xi1>
    %247 = arith.select %246, %244, %233 : vector<16x64xi1>, vector<16x64xf32>
    %cst_30 = arith.constant 0.000000e+00 : f32
    %248 = vector.shape_cast %7 : vector<16x1xi1> to vector<16x1xi1>
    %249 = vector.broadcast %248 : vector<16x1xi1> to vector<16x64xi1>
    %250 = vector.broadcast %cst_30 : f32 to vector<16x64xf32>
    %251 = arith.select %249, %242, %250 : vector<16x64xi1>, vector<16x64xf32>
    %cst_31 = arith.constant 0.000000e+00 : f32
    %252 = vector.shape_cast %7 : vector<16x1xi1> to vector<16x1xi1>
    %253 = vector.broadcast %252 : vector<16x1xi1> to vector<16x64xi1>
    %254 = vector.broadcast %cst_31 : f32 to vector<16x64xf32>
    %255 = arith.select %253, %247, %254 : vector<16x64xi1>, vector<16x64xf32>
    %c0_32 = arith.constant 0 : index
    %c0_33 = arith.constant 0 : index
    %256 = vector.load %arg4[%c0_32, %c0_33] : memref<64x384xf32, #tpu.memory_space<vmem>>, vector<64x384xf32>
    %c0_34 = arith.constant 0 : index
    %c0_35 = arith.constant 0 : index
    %257 = vector.load %arg5[%c0_34, %c0_35] : memref<64x384xf32, #tpu.memory_space<vmem>>, vector<64x384xf32>
    %c0_36 = arith.constant 0 : index
    %c0_37 = arith.constant 0 : index
    %258 = vector.load %arg6[%c0_36, %c0_37] : memref<64x384xf32, #tpu.memory_space<vmem>>, vector<64x384xf32>
    %c0_38 = arith.constant 0 : index
    %c0_39 = arith.constant 0 : index
    %259 = vector.load %arg7[%c0_38, %c0_39] : memref<64x384xf32, #tpu.memory_space<vmem>>, vector<64x384xf32>
    %c0_40 = arith.constant 0 : index
    %c0_41 = arith.constant 0 : index
    %260 = vector.load %arg8[%c0_40, %c0_41] : memref<1x128xf32, #tpu.memory_space<vmem>>, vector<1x128xf32>
    %cst_42 = arith.constant dense<0.000000e+00> : vector<16x384xf32>
    %261 = tpu.matmul %12, %256, %cst_42 {dimension_numbers = #tpu.dot_dimension_numbers<[1], [0], [0], [1], [0, 0, 1, 1], [], []>} : vector<16x64xf32>, vector<64x384xf32>, vector<16x384xf32> -> vector<16x384xf32>
    %cst_43 = arith.constant dense<0.000000e+00> : vector<16x384xf32>
    %262 = tpu.matmul %251, %257, %cst_43 {dimension_numbers = #tpu.dot_dimension_numbers<[1], [0], [0], [1], [0, 0, 1, 1], [], []>} : vector<16x64xf32>, vector<64x384xf32>, vector<16x384xf32> -> vector<16x384xf32>
    %263 = arith.addf %261, %262 : vector<16x384xf32>
    %cst_44 = arith.constant dense<0.000000e+00> : vector<16x384xf32>
    %264 = tpu.matmul %255, %258, %cst_44 {dimension_numbers = #tpu.dot_dimension_numbers<[1], [0], [0], [1], [0, 0, 1, 1], [], []>} : vector<16x64xf32>, vector<64x384xf32>, vector<16x384xf32> -> vector<16x384xf32>
    %265 = arith.addf %263, %264 : vector<16x384xf32>
    %cst_45 = arith.constant dense<0.000000e+00> : vector<16x384xf32>
    %266 = tpu.matmul %21, %259, %cst_45 {dimension_numbers = #tpu.dot_dimension_numbers<[1], [0], [0], [1], [0, 0, 1, 1], [], []>} : vector<16x64xf32>, vector<64x384xf32>, vector<16x384xf32> -> vector<16x384xf32>
    %267 = arith.addf %265, %266 : vector<16x384xf32>
    %268 = vector.extract_strided_slice %267 {offsets = [0, 0], sizes = [16, 128], strides = [1, 1]} : vector<16x384xf32> to vector<16x128xf32>
    %269 = vector.extract_strided_slice %267 {offsets = [0, 128], sizes = [16, 128], strides = [1, 1]} : vector<16x384xf32> to vector<16x128xf32>
    %270 = vector.broadcast %3 : vector<16x1xf32> to vector<16x128xf32>
    %271 = arith.mulf %270, %269 : vector<16x128xf32>
    %272 = arith.addf %268, %271 : vector<16x128xf32>
    %273 = vector.extract_strided_slice %267 {offsets = [0, 256], sizes = [16, 128], strides = [1, 1]} : vector<16x384xf32> to vector<16x128xf32>
    %274 = vector.broadcast %4 : vector<16x1xf32> to vector<16x128xf32>
    %275 = arith.mulf %274, %273 : vector<16x128xf32>
    %276 = arith.addf %272, %275 : vector<16x128xf32>
    %277 = vector.broadcast %260 : vector<1x128xf32> to vector<16x128xf32>
    %278 = arith.addf %276, %277 : vector<16x128xf32>
    %c0_46 = arith.constant 0 : index
    %c0_47 = arith.constant 0 : index
    %279 = vector.load %arg9[%c0_46, %c0_47] : memref<16x128xf32, #tpu.memory_space<vmem>>, vector<16x128xf32>
    tpu.vector_store %arg9[%c0_46, %c0_47], %278 {strides = array<i32>} : memref<16x128xf32, #tpu.memory_space<vmem>>, vector<16x128xf32>,
    return
  }
  func.func @transform_0(%arg0: i32) -> (i32, i32) {
    %c0_i32 = arith.constant 0 : i32
    %c0_i32_0 = arith.constant 0 : i32
    return %c0_i32, %arg0 : i32, i32
  }
  func.func @transform_1(%arg0: i32) -> (i32, i32) {
    %c0_i32 = arith.constant 0 : i32
    %c0_i32_0 = arith.constant 0 : i32
    %c0_i32_1 = arith.constant 0 : i32
    return %c0_i32, %c0_i32_0 : i32, i32
  }
  func.func @transform_2(%arg0: i32) -> (i32, i32) {
    %c0_i32 = arith.constant 0 : i32
    %c0_i32_0 = arith.constant 0 : i32
    %c0_i32_1 = arith.constant 0 : i32
    return %c0_i32, %c0_i32_0 : i32, i32
  }
  func.func @transform_3(%arg0: i32) -> (i32, i32) {
    %c0_i32 = arith.constant 0 : i32
    %c0_i32_0 = arith.constant 0 : i32
    %c0_i32_1 = arith.constant 0 : i32
    return %c0_i32, %c0_i32_0 : i32, i32
  }
  func.func @transform_4(%arg0: i32) -> (i32, i32) {
    %c0_i32 = arith.constant 0 : i32
    %c0_i32_0 = arith.constant 0 : i32
    %c0_i32_1 = arith.constant 0 : i32
    return %c0_i32, %c0_i32_0 : i32, i32
  }
  func.func @transform_5(%arg0: i32) -> (i32, i32) {
    %c0_i32 = arith.constant 0 : i32
    %c0_i32_0 = arith.constant 0 : i32
    %c0_i32_1 = arith.constant 0 : i32
    return %c0_i32, %c0_i32_0 : i32, i32
  }
  func.func @transform_6(%arg0: i32) -> (i32, i32) {
    %c0_i32 = arith.constant 0 : i32
    %c0_i32_0 = arith.constant 0 : i32
    %c0_i32_1 = arith.constant 0 : i32
    return %c0_i32, %c0_i32_0 : i32, i32
  }
  func.func @transform_7(%arg0: i32) -> (i32, i32) {
    %c0_i32 = arith.constant 0 : i32
    %c0_i32_0 = arith.constant 0 : i32
    %c0_i32_1 = arith.constant 0 : i32
    return %c0_i32, %c0_i32_0 : i32, i32
  }
  func.func @transform_8(%arg0: i32) -> (i32, i32) {
    %c0_i32 = arith.constant 0 : i32
    %c0_i32_0 = arith.constant 0 : i32
    return %c0_i32, %arg0 : i32, i32
  }
}

</mosaic_0001>

<llo_original>
// kernel: tpu_custom_call.1
$region0: #{tpu_custom_call.1}
  #allocation0 [shape = 'u32[]', space=smem, size = 0x4, offset = 0x4, fixed_abs, tag = 'smem constant byte address 0x4 - core index']
  #allocation1 [shape = 'u32[144,128]{1,0:T(1,128)}', space=vmem, size = 0x12000, scoped, tag = 'internal scratch']
  %s0 = inlined_call_operand.vmem [shape: f32[16,64], index: 0, kind: input, shape index: {}]
  %s1 = inlined_call_operand.hbm [shape: f32[16,16], index: 1, kind: input, shape index: {}]
  %s2 = inlined_call_operand.vmem [shape: f32[16,4], index: 2, kind: input, shape index: {}]
  %s3 = inlined_call_operand.hbm [shape: f32[64,384], index: 3, kind: input, shape index: {}]
  %s4 = inlined_call_operand.hbm [shape: f32[64,384], index: 4, kind: input, shape index: {}]
  %s5 = inlined_call_operand.hbm [shape: f32[64,384], index: 5, kind: input, shape index: {}]
  %s6 = inlined_call_operand.hbm [shape: f32[64,384], index: 6, kind: input, shape index: {}]
  %s7 = inlined_call_operand.vmem [shape: f32[1,128], index: 7, kind: input, shape index: {}]
  %s8 = inlined_call_operand.hbm [shape: f32[16,128], index: 8, kind: output, shape index: {}]
  %s9 = sld [smem:[#allocation0]]
  $region62: #{tpu_custom_call.1} parent=0
    _
  %s11 = ssub.s32 1, %s9
  %s12 = scalar_select 0, %s11, %s9
  $region1: #{tpu_custom_call.1} parent=0
    #allocation2 [shape = 'u8[8192]{0}', space=vmem, size = 0x2000, scoped, tag = 'input window, operand 1, single buffered']
    #allocation3 [shape = 's32[1]{0}', space=sflag, size = 0x4, scoped, tag = 'scoped memory for tpu_custom_call.1']
    #allocation4 [shape = 's32[1]{0}', space=sflag, size = 0x4, scoped, tag = 'scoped memory for tpu_custom_call.1']
    #allocation5 [shape = 'u8[98304]{0}', space=vmem, size = 0x18000, scoped, tag = 'input window, operand 3, single buffered']
    #allocation6 [shape = 's32[1]{0}', space=sflag, size = 0x4, scoped, tag = 'scoped memory for tpu_custom_call.1']
    #allocation7 [shape = 'u8[98304]{0}', space=vmem, size = 0x18000, scoped, tag = 'input window, operand 4, single buffered']
    #allocation8 [shape = 'u8[98304]{0}', space=vmem, size = 0x18000, scoped, tag = 'input window, operand 5, single buffered']
    #allocation9 [shape = 's32[1]{0}', space=sflag, size = 0x4, scoped, tag = 'scoped memory for tpu_custom_call.1']
    #allocation10 [shape = 'u8[98304]{0}', space=vmem, size = 0x18000, scoped, tag = 'input window, operand 6, single buffered']
    #allocation11 [shape = 'u8[8192]{0}', space=vmem, size = 0x2000, scoped, tag = 'output window, operand 0, single buffered']
    %13 = vsyncpa [#allocation3], 0
    %14 = vsyncpa [#allocation6], 0
    %15 = vsyncpa [#allocation9], 0
    %16 = vsyncpa [#allocation4], 0
    // Predicated region
    $region2: #{tpu_custom_call.1} parent=1 // pred_check
      _
    $region3: #{tpu_custom_call.1} parent=1 // pred_check_branch
      %18 = sbr.rel (0) target = $region5
    $region4: #{tpu_custom_call.1} parent=1 // pred_region
      _
    $region5: #{tpu_custom_call.1} parent=1 // pred_fallthru
      _
    // Predicated region
    $region6: #{tpu_custom_call.1} parent=1 // pred_check
      _
    $region7: #{tpu_custom_call.1} parent=1 // pred_check_branch
      %20 = sbr.rel (0) target = $region9
    $region8: #{tpu_custom_call.1} parent=1 // pred_region
      %s22 = ssub.s32 256, 256
      %23 = vsyncadd [#allocation3], %s22
      %s24 = sshll.u32 [#allocation2], 4
      %s25 = int_to_ptr.vmem [resolvable:$true] %s24
      %30 = dma.hbm_to_vmem [thread:$0]  %s1, 256, %s25, [#allocation3], 128, 128, 8
    $region9: #{tpu_custom_call.1} parent=1 // pred_fallthru
      _
    // Predicated region
    $region10: #{tpu_custom_call.1} parent=1 // pred_check
      _
    $region11: #{tpu_custom_call.1} parent=1 // pred_check_branch
      %32 = sbr.rel (0) target = $region13
    $region12: #{tpu_custom_call.1} parent=1 // pred_region
      _
    $region13: #{tpu_custom_call.1} parent=1 // pred_fallthru
      _
    // Predicated region
    $region14: #{tpu_custom_call.1} parent=1 // pred_check
      _
    $region15: #{tpu_custom_call.1} parent=1 // pred_check_branch
      %34 = sbr.rel (0) target = $region17
    $region16: #{tpu_custom_call.1} parent=1 // pred_region
      %s36 = ssub.s32 3072, 3072
      %37 = vsyncadd [#allocation6], %s36
      %s38 = sshll.u32 [#allocation5], 4
      %s39 = int_to_ptr.vmem [resolvable:$true] %s38
      %44 = dma.hbm_to_vmem [thread:$0]  %s3, 3072, %s39, [#allocation6], 384, 384, 24
    $region17: #{tpu_custom_call.1} parent=1 // pred_fallthru
      _
    // Predicated region
    $region18: #{tpu_custom_call.1} parent=1 // pred_check
      _
    $region19: #{tpu_custom_call.1} parent=1 // pred_check_branch
      %46 = sbr.rel (0) target = $region21
    $region20: #{tpu_custom_call.1} parent=1 // pred_region
      %s48 = ssub.s32 3072, 3072
      %49 = vsyncadd [#allocation6], %s48
      %s50 = sshll.u32 [#allocation7], 4
      %s51 = int_to_ptr.vmem [resolvable:$true] %s50
      %56 = dma.hbm_to_vmem [thread:$0]  %s4, 3072, %s51, [#allocation6], 384, 384, 24
    $region21: #{tpu_custom_call.1} parent=1 // pred_fallthru
      _
    // Predicated region
    $region22: #{tpu_custom_call.1} parent=1 // pred_check
      _
    $region23: #{tpu_custom_call.1} parent=1 // pred_check_branch
      %58 = sbr.rel (0) target = $region25
    $region24: #{tpu_custom_call.1} parent=1 // pred_region
      %s60 = ssub.s32 3072, 3072
      %61 = vsyncadd [#allocation9], %s60
      %s62 = sshll.u32 [#allocation8], 4
      %s63 = int_to_ptr.vmem [resolvable:$true] %s62
      %68 = dma.hbm_to_vmem [thread:$0]  %s5, 3072, %s63, [#allocation9], 384, 384, 24
    $region25: #{tpu_custom_call.1} parent=1 // pred_fallthru
      _
    // Predicated region
    $region26: #{tpu_custom_call.1} parent=1 // pred_check
      _
    $region27: #{tpu_custom_call.1} parent=1 // pred_check_branch
      %70 = sbr.rel (0) target = $region29
    $region28: #{tpu_custom_call.1} parent=1 // pred_region
      %s72 = ssub.s32 3072, 3072
      %73 = vsyncadd [#allocation9], %s72
      %s74 = sshll.u32 [#allocation10], 4
      %s75 = int_to_ptr.vmem [resolvable:$true] %s74
      %80 = dma.hbm_to_vmem [thread:$0]  %s6, 3072, %s75, [#allocation9], 384, 384, 24
    $region29: #{tpu_custom_call.1} parent=1 // pred_fallthru
      _
    // Predicated region
    $region30: #{tpu_custom_call.1} parent=1 // pred_check
      _
    $region31: #{tpu_custom_call.1} parent=1 // pred_check_branch
      %82 = sbr.rel (0) target = $region33
    $region32: #{tpu_custom_call.1} parent=1 // pred_region
      _
    $region33: #{tpu_custom_call.1} parent=1 // pred_fallthru
      _
    // Predicated region
    $region34: #{tpu_custom_call.1} parent=1 // pred_check
      _
    $region35: #{tpu_custom_call.1} parent=1 // pred_check_branch
      %84 = sbr.rel (0) target = $region37
    $region36: #{tpu_custom_call.1} parent=1 // pred_region
      %85 = dma.done [#allocation3], 256
    $region37: #{tpu_custom_call.1} parent=1 // pred_fallthru
      _
    // Predicated region
    $region38: #{tpu_custom_call.1} parent=1 // pred_check
      _
    $region39: #{tpu_custom_call.1} parent=1 // pred_check_branch
      %87 = sbr.rel (0) target = $region41
    $region40: #{tpu_custom_call.1} parent=1 // pred_region
      %88 = dma.done [#allocation6], 3072
    $region41: #{tpu_custom_call.1} parent=1 // pred_fallthru
      _
    // Predicated region
    $region42: #{tpu_custom_call.1} parent=1 // pred_check
      _
    $region43: #{tpu_custom_call.1} parent=1 // pred_check_branch
      %90 = sbr.rel (0) target = $region45
    $region44: #{tpu_custom_call.1} parent=1 // pred_region
      %91 = dma.done [#allocation6], 3072
    $region45: #{tpu_custom_call.1} parent=1 // pred_fallthru
      _
    // Predicated region
    $region46: #{tpu_custom_call.1} parent=1 // pred_check
      _
    $region47: #{tpu_custom_call.1} parent=1 // pred_check_branch
      %93 = sbr.rel (0) target = $region49
    $region48: #{tpu_custom_call.1} parent=1 // pred_region
      %94 = dma.done [#allocation9], 3072
    $region49: #{tpu_custom_call.1} parent=1 // pred_fallthru
      _
    // Predicated region
    $region50: #{tpu_custom_call.1} parent=1 // pred_check
      _
    $region51: #{tpu_custom_call.1} parent=1 // pred_check_branch
      %96 = sbr.rel (0) target = $region53
    $region52: #{tpu_custom_call.1} parent=1 // pred_region
      %97 = dma.done [#allocation9], 3072
    $region53: #{tpu_custom_call.1} parent=1 // pred_fallthru
      _
    %v98 = vld [vmem:[%s0] sm:$0xff]
    %v99 = vld [vmem:[%s0 + $0x8] sm:$0xff]
    %v100 = vld [vmem:[#allocation2] sm:$0xff]
    %v101 = vld [vmem:[#allocation2 + $0x8] sm:$0xff]
    %v102 = vld [vmem:[%s2] sm:$0xff]
    %v103 = vld [vmem:[%s2 + $0x8] sm:$0xff]
    %vm104 = vcmp.gt.f32.partialorder %v102, 0.5
    %vm105 = vcmp.gt.f32.partialorder %v103, 0.5
    %vm106 = vcmask 130048
    %v108 = vsel %vm106, %v100, 0
    %v111 = vsel %vm106, %v101, 0
    %113 = vmatprep.subr.mxu0 0.0
    %114 = vmatpush1.msra.mxu0 0.0
    %115 = vmatprep.subr.mxu0 0.0
    %116 = vmatpush1.msra.mxu0 0.0
    %117 = vmatprep.subr.mxu0 0.0
    %118 = vmatpush1.msra.mxu0 0.0
    %119 = vmatprep.subr.mxu0 0.0
    %120 = vmatpush1.msra.mxu0 0.0
    %121 = vmatprep.subr.mxu0 0.0
    %122 = vmatpush1.msra.mxu0 0.0
    %123 = vmatprep.subr.mxu0 0.0
    %124 = vmatpush1.msra.mxu0 0.0
    %125 = vmatprep.subr.mxu0 0.0
    %126 = vmatpush1.msra.mxu0 0.0
    %127 = vmatprep.subr.mxu0 0.0
    %128 = vmatpush1.msra.mxu0 0.0
    %129 = vmatprep.subr.mxu0 0.0
    %130 = vmatpush1.msra.mxu0 0.0
    %131 = vmatprep.subr.mxu0 0.0
    %132 = vmatpush1.msra.mxu0 0.0
    %133 = vmatprep.subr.mxu0 0.0
    %134 = vmatpush1.msra.mxu0 0.0
    %135 = vmatprep.subr.mxu0 0.0
    %136 = vmatpush1.msra.mxu0 0.0
    %137 = vmatprep.subr.mxu0 0.0
    %138 = vmatpush1.msra.mxu0 0.0
    %139 = vmatprep.subr.mxu0 0.0
    %140 = vmatpush1.msra.mxu0 0.0
    %141 = vmatprep.subr.mxu0 0.0
    %142 = vmatpush1.msra.mxu0 %v99
    %143 = vmatprep.subr.mxu0 0.0
    %144 = vmatpush1.msra.mxu0 %v98
    %145 = vmatprep.subr.mxu0 0.0
    %146 = vmatpush2.msra.mxu0 0.0
    %147 = vmatprep.subr.mxu0 0.0
    %148 = vmatpush2.msra.mxu0 0.0
    %149 = vmatprep.subr.mxu0 0.0
    %150 = vmatpush2.msra.mxu0 0.0
    %151 = vmatprep.subr.mxu0 0.0
    %152 = vmatpush2.msra.mxu0 0.0
    %153 = vmatprep.subr.mxu0 0.0
    %154 = vmatpush2.msra.mxu0 0.0
    %155 = vmatprep.subr.mxu0 0.0
    %156 = vmatpush2.msra.mxu0 0.0
    %157 = vmatprep.subr.mxu0 0.0
    %158 = vmatpush2.msra.mxu0 0.0
    %159 = vmatprep.subr.mxu0 0.0
    %160 = vmatpush2.msra.mxu0 0.0
    %161 = vmatprep.subr.mxu0 0.0
    %162 = vmatpush2.msra.mxu0 0.0
    %163 = vmatprep.subr.mxu0 0.0
    %164 = vmatpush2.msra.mxu0 0.0
    %165 = vmatprep.subr.mxu0 0.0
    %166 = vmatpush2.msra.mxu0 0.0
    %167 = vmatprep.subr.mxu0 0.0
    %168 = vmatpush2.msra.mxu0 0.0
    %169 = vmatprep.subr.mxu0 0.0
    %170 = vmatpush2.msra.mxu0 0.0
    %171 = vmatprep.subr.mxu0 0.0
    %172 = vmatpush2.msra.mxu0 0.0
    %173 = vmatprep.subr.mxu0 0.0
    %174 = vmatpush2.msra.mxu0 0.0
    %175 = vmatprep.subr.mxu0 0.0
    %176 = vmatpush2.msra.mxu0 0.0
    %177 = vmatprep.mubr.f32.mxu0 0.0
    %178 = vmatmul.mubr.f32.gmra.mxu0 %v108
    %v179 = vpop.f32.mrf.mxu0
    %v180 = vadd.f32 0.0, %v179
    %v181 = vpop.f32.mrf.mxu0
    %182 = vmatprep.mubr.f32.mxu0 0.0
    %183 = vmatmul.mubr.f32.gmra.mxu0 %v111
    %v184 = vpop.f32.mrf.mxu0
    %v185 = vadd.f32 0.0, %v184
    %v186 = vpop.f32.mrf.mxu0
    %187 = vdwg.mxu0
    %v188 = vmul.f32 %v98, %v98
    %v189 = vmul.f32 %v99, %v99
    %190 = vmatprep.subr.mxu0 0.0
    %191 = vmatpush1.msra.mxu0 0.0
    %192 = vmatprep.subr.mxu0 0.0
    %193 = vmatpush1.msra.mxu0 0.0
    %194 = vmatprep.subr.mxu0 0.0
    %195 = vmatpush1.msra.mxu0 0.0
    %196 = vmatprep.subr.mxu0 0.0
    %197 = vmatpush1.msra.mxu0 0.0
    %198 = vmatprep.subr.mxu0 0.0
    %199 = vmatpush1.msra.mxu0 0.0
    %200 = vmatprep.subr.mxu0 0.0
    %201 = vmatpush1.msra.mxu0 0.0
    %202 = vmatprep.subr.mxu0 0.0
    %203 = vmatpush1.msra.mxu0 0.0
    %204 = vmatprep.subr.mxu0 0.0
    %205 = vmatpush1.msra.mxu0 0.0
    %206 = vmatprep.subr.mxu0 0.0
    %207 = vmatpush1.msra.mxu0 0.0
    %208 = vmatprep.subr.mxu0 0.0
    %209 = vmatpush1.msra.mxu0 0.0
    %210 = vmatprep.subr.mxu0 0.0
    %211 = vmatpush1.msra.mxu0 0.0
    %212 = vmatprep.subr.mxu0 0.0
    %213 = vmatpush1.msra.mxu0 0.0
    %214 = vmatprep.subr.mxu0 0.0
    %215 = vmatpush1.msra.mxu0 0.0
    %216 = vmatprep.subr.mxu0 0.0
    %217 = vmatpush1.msra.mxu0 0.0
    %218 = vmatprep.subr.mxu0 0.0
    %219 = vmatpush1.msra.mxu0 %v189
    %220 = vmatprep.subr.mxu0 0.0
    %221 = vmatpush1.msra.mxu0 %v188
    %222 = vmatprep.subr.mxu0 0.0
    %223 = vmatpush2.msra.mxu0 0.0
    %224 = vmatprep.subr.mxu0 0.0
    %225 = vmatpush2.msra.mxu0 0.0
    %226 = vmatprep.subr.mxu0 0.0
    %227 = vmatpush2.msra.mxu0 0.0
    %228 = vmatprep.subr.mxu0 0.0
    %229 = vmatpush2.msra.mxu0 0.0
    %230 = vmatprep.subr.mxu0 0.0
    %231 = vmatpush2.msra.mxu0 0.0
    %232 = vmatprep.subr.mxu0 0.0
    %233 = vmatpush2.msra.mxu0 0.0
    %234 = vmatprep.subr.mxu0 0.0
    %235 = vmatpush2.msra.mxu0 0.0
    %236 = vmatprep.subr.mxu0 0.0
    %237 = vmatpush2.msra.mxu0 0.0
    %238 = vmatprep.subr.mxu0 0.0
    %239 = vmatpush2.msra.mxu0 0.0
    %240 = vmatprep.subr.mxu0 0.0
    %241 = vmatpush2.msra.mxu0 0.0
    %242 = vmatprep.subr.mxu0 0.0
    %243 = vmatpush2.msra.mxu0 0.0
    %244 = vmatprep.subr.mxu0 0.0
    %245 = vmatpush2.msra.mxu0 0.0
    %246 = vmatprep.subr.mxu0 0.0
    %247 = vmatpush2.msra.mxu0 0.0
    %248 = vmatprep.subr.mxu0 0.0
    %249 = vmatpush2.msra.mxu0 0.0
    %250 = vmatprep.subr.mxu0 0.0
    %251 = vmatpush2.msra.mxu0 0.0
    %252 = vmatprep.subr.mxu0 0.0
    %253 = vmatpush2.msra.mxu0 0.0
    %254 = vmatprep.mubr.f32.mxu0 0.0
    %255 = vmatmul.mubr.f32.gmra.mxu0 %v108
    %v256 = vpop.f32.mrf.mxu0
    %v257 = vadd.f32 0.0, %v256
    %v258 = vpop.f32.mrf.mxu0
    %259 = vmatprep.mubr.f32.mxu0 0.0
    %260 = vmatmul.mubr.f32.gmra.mxu0 %v111
    %v261 = vpop.f32.mrf.mxu0
    %v262 = vadd.f32 0.0, %v261
    %v263 = vpop.f32.mrf.mxu0
    %264 = vdwg.mxu0
    %266 = vset.pattern.permute.xlu0 0
    %267 = vperm.xlu0 %266, %v102
    %v268 = vpop.permute.xlu0 %267
    %271 = vset.pattern.permute.xlu0 0
    %272 = vperm.xlu0 %271, %v103
    %v273 = vpop.permute.xlu0 %272
    %v275 = vmul.f32 %v180, %v268
    %v276 = vmul.f32 %v185, %v273
    %v277 = vmul.f32 %v257, %v268
    %v278 = vmul.f32 %v262, %v273
    %v279 = vmul.f32 %v275, %v275
    %v280 = vmul.f32 %v276, %v276
    %v281 = vsub.f32 %v277, %v279
    %v282 = vsub.f32 %v278, %v280
    %v283 = vmax.f32 %v281, 0.0
    %v284 = vmax.f32 %v282, 0.0
    %v285 = vadd.f32 %v283, 1e-05
    %v286 = vadd.f32 %v284, 1e-05
    %v287 = vrsqrt.pop %v285
    %v288 = vmul.f32 %v285, %v287
    %vm289 = vcmp.eq.f32.partialorder %v285, inf
    %v290 = vsel %vm289, %v285, %v288
    %vm291 = vcmp.eq.f32.partialorder %v285, 0.0
    %v292 = vand.u32 %v285, 2147483648
    %v293 = vsel %vm291, %v292, %v290
    %v294 = vrsqrt.pop %v286
    %v295 = vmul.f32 %v286, %v294
    %vm296 = vcmp.eq.f32.partialorder %v286, inf
    %v297 = vsel %vm296, %v286, %v295
    %vm298 = vcmp.eq.f32.partialorder %v286, 0.0
    %v299 = vand.u32 %v286, 2147483648
    %v300 = vsel %vm298, %v299, %v297
    %vm301 = vcmp.gt.f32.partialorder %v100, 0.0
    %vm302 = vcmp.gt.f32.partialorder %v101, 0.0
    %v303 = vlaneseq
    %v304 = vshrl.u32 %v303, 7
    %v305 = vsub.s32 0, %v304
    %v306 = vrot.slane %v98, %v305
    %v307 = vsel %vm301, 1, 0
    %v308 = vsel %vm302, 1, 0
    %309 = vset.pattern.permute.xlu0 0
    %310 = vperm.xlu0 %309, %v307
    %v311 = vpop.permute.xlu0 %310
    %312 = vset.pattern.permute.xlu0 0
    %313 = vperm.xlu0 %312, %v308
    %v314 = vpop.permute.xlu0 %313
    %vm315 = vcmp.eq.s32.totalorder %v311, 1
    %vm316 = vcmp.eq.s32.totalorder %v314, 1
    %v317 = vsel %vm315, %v306, -inf
    %v318 = vsel %vm316, %v306, -inf
    %v319 = vsel %vm315, %v306, inf
    %v320 = vsel %vm316, %v306, inf
    %v321 = vlaneseq
    %v322 = vshrl.u32 %v321, 7
    %v323 = vsub.s32 1, %v322
    %v324 = vrot.slane %v98, %v323
    %v325 = vmax.f32 %v317, %v324
    %v326 = vmax.f32 %v318, %v324
    %327 = vset.pattern.permute.xlu0 1
    %328 = vperm.xlu0 %327, %v307
    %v329 = vpop.permute.xlu0 %328
    %330 = vset.pattern.permute.xlu0 1
    %331 = vperm.xlu0 %330, %v308
    %v332 = vpop.permute.xlu0 %331
    %vm333 = vcmp.eq.s32.totalorder %v329, 1
    %vm334 = vcmp.eq.s32.totalorder %v332, 1
    %v335 = vsel %vm333, %v325, %v317
    %v336 = vsel %vm334, %v326, %v318
    %v337 = vmin.f32 %v319, %v324
    %v338 = vmin.f32 %v320, %v324
    %v339 = vsel %vm333, %v337, %v319
    %v340 = vsel %vm334, %v338, %v320
    %v341 = vlaneseq
    %v342 = vshrl.u32 %v341, 7
    %v343 = vsub.s32 2, %v342
    %v344 = vrot.slane %v98, %v343
    %v345 = vmax.f32 %v335, %v344
    %v346 = vmax.f32 %v336, %v344
    %347 = vset.pattern.permute.xlu0 2
    %348 = vperm.xlu0 %347, %v307
    %v349 = vpop.permute.xlu0 %348
    %350 = vset.pattern.permute.xlu0 2
    %351 = vperm.xlu0 %350, %v308
    %v352 = vpop.permute.xlu0 %351
    %vm353 = vcmp.eq.s32.totalorder %v349, 1
    %vm354 = vcmp.eq.s32.totalorder %v352, 1
    %v355 = vsel %vm353, %v345, %v335
    %v356 = vsel %vm354, %v346, %v336
    %v357 = vmin.f32 %v339, %v344
    %v358 = vmin.f32 %v340, %v344
    %v359 = vsel %vm353, %v357, %v339
    %v360 = vsel %vm354, %v358, %v340
    %v361 = vlaneseq
    %v362 = vshrl.u32 %v361, 7
    %v363 = vsub.s32 3, %v362
    %v364 = vrot.slane %v98, %v363
    %v365 = vmax.f32 %v355, %v364
    %v366 = vmax.f32 %v356, %v364
    %367 = vset.pattern.permute.xlu0 3
    %368 = vperm.xlu0 %367, %v307
    %v369 = vpop.permute.xlu0 %368
    %370 = vset.pattern.permute.xlu0 3
    %371 = vperm.xlu0 %370, %v308
    %v372 = vpop.permute.xlu0 %371
    %vm373 = vcmp.eq.s32.totalorder %v369, 1
    %vm374 = vcmp.eq.s32.totalorder %v372, 1
    %v375 = vsel %vm373, %v365, %v355
    %v376 = vsel %vm374, %v366, %v356
    %v377 = vmin.f32 %v359, %v364
    %v378 = vmin.f32 %v360, %v364
    %v379 = vsel %vm373, %v377, %v359
    %v380 = vsel %vm374, %v378, %v360
    %v381 = vlaneseq
    %v382 = vshrl.u32 %v381, 7
    %v383 = vsub.s32 4, %v382
    %v384 = vrot.slane %v98, %v383
    %v385 = vmax.f32 %v375, %v384
    %v386 = vmax.f32 %v376, %v384
    %387 = vset.pattern.permute.xlu0 4
    %388 = vperm.xlu0 %387, %v307
    %v389 = vpop.permute.xlu0 %388
    %390 = vset.pattern.permute.xlu0 4
    %391 = vperm.xlu0 %390, %v308
    %v392 = vpop.permute.xlu0 %391
    %vm393 = vcmp.eq.s32.totalorder %v389, 1
    %vm394 = vcmp.eq.s32.totalorder %v392, 1
    %v395 = vsel %vm393, %v385, %v375
    %v396 = vsel %vm394, %v386, %v376
    %v397 = vmin.f32 %v379, %v384
    %v398 = vmin.f32 %v380, %v384
    %v399 = vsel %vm393, %v397, %v379
    %v400 = vsel %vm394, %v398, %v380
    %v401 = vlaneseq
    %v402 = vshrl.u32 %v401, 7
    %v403 = vsub.s32 5, %v402
    %v404 = vrot.slane %v98, %v403
    %v405 = vmax.f32 %v395, %v404
    %v406 = vmax.f32 %v396, %v404
    %407 = vset.pattern.permute.xlu0 5
    %408 = vperm.xlu0 %407, %v307
    %v409 = vpop.permute.xlu0 %408
    %410 = vset.pattern.permute.xlu0 5
    %411 = vperm.xlu0 %410, %v308
    %v412 = vpop.permute.xlu0 %411
    %vm413 = vcmp.eq.s32.totalorder %v409, 1
    %vm414 = vcmp.eq.s32.totalorder %v412, 1
    %v415 = vsel %vm413, %v405, %v395
    %v416 = vsel %vm414, %v406, %v396
    %v417 = vmin.f32 %v399, %v404
    %v418 = vmin.f32 %v400, %v404
    %v419 = vsel %vm413, %v417, %v399
    %v420 = vsel %vm414, %v418, %v400
    %v421 = vlaneseq
    %v422 = vshrl.u32 %v421, 7
    %v423 = vsub.s32 6, %v422
    %v424 = vrot.slane %v98, %v423
    %v425 = vmax.f32 %v415, %v424
    %v426 = vmax.f32 %v416, %v424
    %427 = vset.pattern.permute.xlu0 6
    %428 = vperm.xlu0 %427, %v307
    %v429 = vpop.permute.xlu0 %428
    %430 = vset.pattern.permute.xlu0 6
    %431 = vperm.xlu0 %430, %v308
    %v432 = vpop.permute.xlu0 %431
    %vm433 = vcmp.eq.s32.totalorder %v429, 1
    %vm434 = vcmp.eq.s32.totalorder %v432, 1
    %v435 = vsel %vm433, %v425, %v415
    %v436 = vsel %vm434, %v426, %v416
    %v437 = vmin.f32 %v419, %v424
    %v438 = vmin.f32 %v420, %v424
    %v439 = vsel %vm433, %v437, %v419
    %v440 = vsel %vm434, %v438, %v420
    %v441 = vlaneseq
    %v442 = vshrl.u32 %v441, 7
    %v443 = vsub.s32 7, %v442
    %v444 = vrot.slane %v98, %v443
    %v445 = vmax.f32 %v435, %v444
    %v446 = vmax.f32 %v436, %v444
    %447 = vset.pattern.permute.xlu0 7
    %448 = vperm.xlu0 %447, %v307
    %v449 = vpop.permute.xlu0 %448
    %450 = vset.pattern.permute.xlu0 7
    %451 = vperm.xlu0 %450, %v308
    %v452 = vpop.permute.xlu0 %451
    %vm453 = vcmp.eq.s32.totalorder %v449, 1
    %vm454 = vcmp.eq.s32.totalorder %v452, 1
    %v455 = vsel %vm453, %v445, %v435
    %v456 = vsel %vm454, %v446, %v436
    %v457 = vmin.f32 %v439, %v444
    %v458 = vmin.f32 %v440, %v444
    %v459 = vsel %vm453, %v457, %v439
    %v460 = vsel %vm454, %v458, %v440
    %v461 = vlaneseq
    %v462 = vshrl.u32 %v461, 7
    %v463 = vsub.s32 0, %v462
    %v464 = vrot.slane %v99, %v463
    %v465 = vmax.f32 %v455, %v464
    %v466 = vmax.f32 %v456, %v464
    %467 = vset.pattern.permute.xlu0 8
    %468 = vperm.xlu0 %467, %v307
    %v469 = vpop.permute.xlu0 %468
    %470 = vset.pattern.permute.xlu0 8
    %471 = vperm.xlu0 %470, %v308
    %v472 = vpop.permute.xlu0 %471
    %vm473 = vcmp.eq.s32.totalorder %v469, 1
    %vm474 = vcmp.eq.s32.totalorder %v472, 1
    %v475 = vsel %vm473, %v465, %v455
    %v476 = vsel %vm474, %v466, %v456
    %v477 = vmin.f32 %v459, %v464
    %v478 = vmin.f32 %v460, %v464
    %v479 = vsel %vm473, %v477, %v459
    %v480 = vsel %vm474, %v478, %v460
    %v481 = vlaneseq
    %v482 = vshrl.u32 %v481, 7
    %v483 = vsub.s32 1, %v482
    %v484 = vrot.slane %v99, %v483
    %v485 = vmax.f32 %v475, %v484
    %v486 = vmax.f32 %v476, %v484
    %487 = vset.pattern.permute.xlu0 9
    %488 = vperm.xlu0 %487, %v307
    %v489 = vpop.permute.xlu0 %488
    %490 = vset.pattern.permute.xlu0 9
    %491 = vperm.xlu0 %490, %v308
    %v492 = vpop.permute.xlu0 %491
    %vm493 = vcmp.eq.s32.totalorder %v489, 1
    %vm494 = vcmp.eq.s32.totalorder %v492, 1
    %v495 = vsel %vm493, %v485, %v475
    %v496 = vsel %vm494, %v486, %v476
    %v497 = vmin.f32 %v479, %v484
    %v498 = vmin.f32 %v480, %v484
    %v499 = vsel %vm493, %v497, %v479
    %v500 = vsel %vm494, %v498, %v480
    %v501 = vlaneseq
    %v502 = vshrl.u32 %v501, 7
    %v503 = vsub.s32 2, %v502
    %v504 = vrot.slane %v99, %v503
    %v505 = vmax.f32 %v495, %v504
    %v506 = vmax.f32 %v496, %v504
    %507 = vset.pattern.permute.xlu0 10
    %508 = vperm.xlu0 %507, %v307
    %v509 = vpop.permute.xlu0 %508
    %510 = vset.pattern.permute.xlu0 10
    %511 = vperm.xlu0 %510, %v308
    %v512 = vpop.permute.xlu0 %511
    %vm513 = vcmp.eq.s32.totalorder %v509, 1
    %vm514 = vcmp.eq.s32.totalorder %v512, 1
    %v515 = vsel %vm513, %v505, %v495
    %v516 = vsel %vm514, %v506, %v496
    %v517 = vmin.f32 %v499, %v504
    %v518 = vmin.f32 %v500, %v504
    %v519 = vsel %vm513, %v517, %v499
    %v520 = vsel %vm514, %v518, %v500
    %v521 = vlaneseq
    %v522 = vshrl.u32 %v521, 7
    %v523 = vsub.s32 3, %v522
    %v524 = vrot.slane %v99, %v523
    %v525 = vmax.f32 %v515, %v524
    %v526 = vmax.f32 %v516, %v524
    %527 = vset.pattern.permute.xlu0 11
    %528 = vperm.xlu0 %527, %v307
    %v529 = vpop.permute.xlu0 %528
    %530 = vset.pattern.permute.xlu0 11
    %531 = vperm.xlu0 %530, %v308
    %v532 = vpop.permute.xlu0 %531
    %vm533 = vcmp.eq.s32.totalorder %v529, 1
    %vm534 = vcmp.eq.s32.totalorder %v532, 1
    %v535 = vsel %vm533, %v525, %v515
    %v536 = vsel %vm534, %v526, %v516
    %v537 = vmin.f32 %v519, %v524
    %v538 = vmin.f32 %v520, %v524
    %v539 = vsel %vm533, %v537, %v519
    %v540 = vsel %vm534, %v538, %v520
    %v541 = vlaneseq
    %v542 = vshrl.u32 %v541, 7
    %v543 = vsub.s32 4, %v542
    %v544 = vrot.slane %v99, %v543
    %v545 = vmax.f32 %v535, %v544
    %v546 = vmax.f32 %v536, %v544
    %547 = vset.pattern.permute.xlu0 12
    %548 = vperm.xlu0 %547, %v307
    %v549 = vpop.permute.xlu0 %548
    %550 = vset.pattern.permute.xlu0 12
    %551 = vperm.xlu0 %550, %v308
    %v552 = vpop.permute.xlu0 %551
    %vm553 = vcmp.eq.s32.totalorder %v549, 1
    %vm554 = vcmp.eq.s32.totalorder %v552, 1
    %v555 = vsel %vm553, %v545, %v535
    %v556 = vsel %vm554, %v546, %v536
    %v557 = vmin.f32 %v539, %v544
    %v558 = vmin.f32 %v540, %v544
    %v559 = vsel %vm553, %v557, %v539
    %v560 = vsel %vm554, %v558, %v540
    %v561 = vlaneseq
    %v562 = vshrl.u32 %v561, 7
    %v563 = vsub.s32 5, %v562
    %v564 = vrot.slane %v99, %v563
    %v565 = vmax.f32 %v555, %v564
    %v566 = vmax.f32 %v556, %v564
    %567 = vset.pattern.permute.xlu0 13
    %568 = vperm.xlu0 %567, %v307
    %v569 = vpop.permute.xlu0 %568
    %570 = vset.pattern.permute.xlu0 13
    %571 = vperm.xlu0 %570, %v308
    %v572 = vpop.permute.xlu0 %571
    %vm573 = vcmp.eq.s32.totalorder %v569, 1
    %vm574 = vcmp.eq.s32.totalorder %v572, 1
    %v575 = vsel %vm573, %v565, %v555
    %v576 = vsel %vm574, %v566, %v556
    %v577 = vmin.f32 %v559, %v564
    %v578 = vmin.f32 %v560, %v564
    %v579 = vsel %vm573, %v577, %v559
    %v580 = vsel %vm574, %v578, %v560
    %v581 = vlaneseq
    %v582 = vshrl.u32 %v581, 7
    %v583 = vsub.s32 6, %v582
    %v584 = vrot.slane %v99, %v583
    %v585 = vmax.f32 %v575, %v584
    %v586 = vmax.f32 %v576, %v584
    %587 = vset.pattern.permute.xlu0 14
    %588 = vperm.xlu0 %587, %v307
    %v589 = vpop.permute.xlu0 %588
    %590 = vset.pattern.permute.xlu0 14
    %591 = vperm.xlu0 %590, %v308
    %v592 = vpop.permute.xlu0 %591
    %vm593 = vcmp.eq.s32.totalorder %v589, 1
    %vm594 = vcmp.eq.s32.totalorder %v592, 1
    %v595 = vsel %vm593, %v585, %v575
    %v596 = vsel %vm594, %v586, %v576
    %v597 = vmin.f32 %v579, %v584
    %v598 = vmin.f32 %v580, %v584
    %v599 = vsel %vm593, %v597, %v579
    %v600 = vsel %vm594, %v598, %v580
    %v601 = vlaneseq
    %v602 = vshrl.u32 %v601, 7
    %v603 = vsub.s32 7, %v602
    %v604 = vrot.slane %v99, %v603
    %v605 = vmax.f32 %v595, %v604
    %v606 = vmax.f32 %v596, %v604
    %607 = vset.pattern.permute.xlu0 15
    %608 = vperm.xlu0 %607, %v307
    %v609 = vpop.permute.xlu0 %608
    %610 = vset.pattern.permute.xlu0 15
    %611 = vperm.xlu0 %610, %v308
    %v612 = vpop.permute.xlu0 %611
    %vm613 = vcmp.eq.s32.totalorder %v609, 1
    %vm614 = vcmp.eq.s32.totalorder %v612, 1
    %v615 = vsel %vm613, %v605, %v595
    %v616 = vsel %vm614, %v606, %v596
    %v617 = vmin.f32 %v599, %v604
    %v618 = vmin.f32 %v600, %v604
    %v619 = vsel %vm613, %v617, %v599
    %v620 = vsel %vm614, %v618, %v600
    %v621 = vsel %vm104, 1, 0
    %v622 = vsel %vm105, 1, 0
    %623 = vset.pattern.permute.xlu0 3
    %624 = vperm.xlu0 %623, %v621
    %v625 = vpop.permute.xlu0 %624
    %626 = vset.pattern.permute.xlu0 3
    %627 = vperm.xlu0 %626, %v622
    %v628 = vpop.permute.xlu0 %627
    %vm629 = vcmp.eq.s32.totalorder %v625, 1
    %vm630 = vcmp.eq.s32.totalorder %v628, 1
    %v631 = vsel %vm629, %v615, 0.0
    %v632 = vsel %vm630, %v616, 0.0
    %v633 = vsel %vm629, %v619, 0.0
    %v634 = vsel %vm630, %v620, 0.0
    %v635 = vld [vmem:[#allocation5] sm:$0xff]
    %v636 = vld [vmem:[#allocation5 + $0x8] sm:$0xff]
    %v637 = vld [vmem:[#allocation5 + $0x10] sm:$0xff]
    %v638 = vld [vmem:[#allocation5 + $0x18] sm:$0xff]
    %v639 = vld [vmem:[#allocation5 + $0x20] sm:$0xff]
    %v640 = vld [vmem:[#allocation5 + $0x28] sm:$0xff]
    %v641 = vld [vmem:[#allocation5 + $0x30] sm:$0xff]
    %v642 = vld [vmem:[#allocation5 + $0x38] sm:$0xff]
    %v643 = vld [vmem:[#allocation5 + $0x40] sm:$0xff]
    %v644 = vld [vmem:[#allocation5 + $0x48] sm:$0xff]
    %v645 = vld [vmem:[#allocation5 + $0x50] sm:$0xff]
    %v646 = vld [vmem:[#allocation5 + $0x58] sm:$0xff]
    %v647 = vld [vmem:[#allocation5 + $0x60] sm:$0xff]
    %v648 = vld [vmem:[#allocation5 + $0x68] sm:$0xff]
    %v649 = vld [vmem:[#allocation5 + $0x70] sm:$0xff]
    %v650 = vld [vmem:[#allocation5 + $0x78] sm:$0xff]
    %v651 = vld [vmem:[#allocation5 + $0x80] sm:$0xff]
    %v652 = vld [vmem:[#allocation5 + $0x88] sm:$0xff]
    %v653 = vld [vmem:[#allocation5 + $0x90] sm:$0xff]
    %v654 = vld [vmem:[#allocation5 + $0x98] sm:$0xff]
    %v655 = vld [vmem:[#allocation5 + $0xa0] sm:$0xff]
    %v656 = vld [vmem:[#allocation5 + $0xa8] sm:$0xff]
    %v657 = vld [vmem:[#allocation5 + $0xb0] sm:$0xff]
    %v658 = vld [vmem:[#allocation5 + $0xb8] sm:$0xff]
    %v659 = vld [vmem:[#allocation7] sm:$0xff]
    %v660 = vld [vmem:[#allocation7 + $0x8] sm:$0xff]
    %v661 = vld [vmem:[#allocation7 + $0x10] sm:$0xff]
    %v662 = vld [vmem:[#allocation7 + $0x18] sm:$0xff]
    %v663 = vld [vmem:[#allocation7 + $0x20] sm:$0xff]
    %v664 = vld [vmem:[#allocation7 + $0x28] sm:$0xff]
    %v665 = vld [vmem:[#allocation7 + $0x30] sm:$0xff]
    %v666 = vld [vmem:[#allocation7 + $0x38] sm:$0xff]
    %v667 = vld [vmem:[#allocation7 + $0x40] sm:$0xff]
    %v668 = vld [vmem:[#allocation7 + $0x48] sm:$0xff]
    %v669 = vld [vmem:[#allocation7 + $0x50] sm:$0xff]
    %v670 = vld [vmem:[#allocation7 + $0x58] sm:$0xff]
    %v671 = vld [vmem:[#allocation7 + $0x60] sm:$0xff]
    %v672 = vld [vmem:[#allocation7 + $0x68] sm:$0xff]
    %v673 = vld [vmem:[#allocation7 + $0x70] sm:$0xff]
    %v674 = vld [vmem:[#allocation7 + $0x78] sm:$0xff]
    %v675 = vld [vmem:[#allocation7 + $0x80] sm:$0xff]
    %v676 = vld [vmem:[#allocation7 + $0x88] sm:$0xff]
    %v677 = vld [vmem:[#allocation7 + $0x90] sm:$0xff]
    %v678 = vld [vmem:[#allocation7 + $0x98] sm:$0xff]
    %v679 = vld [vmem:[#allocation7 + $0xa0] sm:$0xff]
    %v680 = vld [vmem:[#allocation7 + $0xa8] sm:$0xff]
    %v681 = vld [vmem:[#allocation7 + $0xb0] sm:$0xff]
    %v682 = vld [vmem:[#allocation7 + $0xb8] sm:$0xff]
    %v683 = vld [vmem:[#allocation8] sm:$0xff]
    %v684 = vld [vmem:[#allocation8 + $0x8] sm:$0xff]
    %v685 = vld [vmem:[#allocation8 + $0x10] sm:$0xff]
    %v686 = vld [vmem:[#allocation8 + $0x18] sm:$0xff]
    %v687 = vld [vmem:[#allocation8 + $0x20] sm:$0xff]
    %v688 = vld [vmem:[#allocation8 + $0x28] sm:$0xff]
    %v689 = vld [vmem:[#allocation8 + $0x30] sm:$0xff]
    %v690 = vld [vmem:[#allocation8 + $0x38] sm:$0xff]
    %v691 = vld [vmem:[#allocation8 + $0x40] sm:$0xff]
    %v692 = vld [vmem:[#allocation8 + $0x48] sm:$0xff]
    %v693 = vld [vmem:[#allocation8 + $0x50] sm:$0xff]
    %v694 = vld [vmem:[#allocation8 + $0x58] sm:$0xff]
    %v695 = vld [vmem:[#allocation8 + $0x60] sm:$0xff]
    %v696 = vld [vmem:[#allocation8 + $0x68] sm:$0xff]
    %v697 = vld [vmem:[#allocation8 + $0x70] sm:$0xff]
    %v698 = vld [vmem:[#allocation8 + $0x78] sm:$0xff]
    %v699 = vld [vmem:[#allocation8 + $0x80] sm:$0xff]
    %v700 = vld [vmem:[#allocation8 + $0x88] sm:$0xff]
    %v701 = vld [vmem:[#allocation8 + $0x90] sm:$0xff]
    %v702 = vld [vmem:[#allocation8 + $0x98] sm:$0xff]
    %v703 = vld [vmem:[#allocation8 + $0xa0] sm:$0xff]
    %v704 = vld [vmem:[#allocation8 + $0xa8] sm:$0xff]
    %v705 = vld [vmem:[#allocation8 + $0xb0] sm:$0xff]
    %v706 = vld [vmem:[#allocation8 + $0xb8] sm:$0xff]
    %v707 = vld [vmem:[#allocation10] sm:$0xff]
    %v708 = vld [vmem:[#allocation10 + $0x8] sm:$0xff]
    %v709 = vld [vmem:[#allocation10 + $0x10] sm:$0xff]
    %v710 = vld [vmem:[#allocation10 + $0x18] sm:$0xff]
    %v711 = vld [vmem:[#allocation10 + $0x20] sm:$0xff]
    %v712 = vld [vmem:[#allocation10 + $0x28] sm:$0xff]
    %v713 = vld [vmem:[#allocation10 + $0x30] sm:$0xff]
    %v714 = vld [vmem:[#allocation10 + $0x38] sm:$0xff]
    %v715 = vld [vmem:[#allocation10 + $0x40] sm:$0xff]
    %v716 = vld [vmem:[#allocation10 + $0x48] sm:$0xff]
    %v717 = vld [vmem:[#allocation10 + $0x50] sm:$0xff]
    %v718 = vld [vmem:[#allocation10 + $0x58] sm:$0xff]
    %v719 = vld [vmem:[#allocation10 + $0x60] sm:$0xff]
    %v720 = vld [vmem:[#allocation10 + $0x68] sm:$0xff]
    %v721 = vld [vmem:[#allocation10 + $0x70] sm:$0xff]
    %v722 = vld [vmem:[#allocation10 + $0x78] sm:$0xff]
    %v723 = vld [vmem:[#allocation10 + $0x80] sm:$0xff]
    %v724 = vld [vmem:[#allocation10 + $0x88] sm:$0xff]
    %v725 = vld [vmem:[#allocation10 + $0x90] sm:$0xff]
    %v726 = vld [vmem:[#allocation10 + $0x98] sm:$0xff]
    %v727 = vld [vmem:[#allocation10 + $0xa0] sm:$0xff]
    %v728 = vld [vmem:[#allocation10 + $0xa8] sm:$0xff]
    %v729 = vld [vmem:[#allocation10 + $0xb0] sm:$0xff]
    %v730 = vld [vmem:[#allocation10 + $0xb8] sm:$0xff]
    %v731 = vld [vmem:[%s7] sm:$0x1]
    %vm732 = vcmask 523264
    %v734 = vsel %vm732, %v631, 0
    %v737 = vsel %vm732, %v632, 0
    %739 = vmatprep.subr.mxu0 0.0
    %740 = vmatpush1.msra.mxu0 0.0
    %741 = vmatprep.subr.mxu0 0.0
    %742 = vmatpush1.msra.mxu0 0.0
    %743 = vmatprep.subr.mxu0 0.0
    %744 = vmatpush1.msra.mxu0 0.0
    %745 = vmatprep.subr.mxu0 0.0
    %746 = vmatpush1.msra.mxu0 0.0
    %747 = vmatprep.subr.mxu0 0.0
    %748 = vmatpush1.msra.mxu0 0.0
    %749 = vmatprep.subr.mxu0 0.0
    %750 = vmatpush1.msra.mxu0 0.0
    %751 = vmatprep.subr.mxu0 0.0
    %752 = vmatpush1.msra.mxu0 0.0
    %753 = vmatprep.subr.mxu0 0.0
    %754 = vmatpush1.msra.mxu0 0.0
    %755 = vmatprep.subr.mxu0 %v681
    %756 = vmatpush1.msra.mxu0 %v680
    %757 = vmatprep.subr.mxu0 %v678
    %758 = vmatpush1.msra.mxu0 %v677
    %759 = vmatprep.subr.mxu0 %v675
    %760 = vmatpush1.msra.mxu0 %v674
    %761 = vmatprep.subr.mxu0 %v672
    %762 = vmatpush1.msra.mxu0 %v671
    %763 = vmatprep.subr.mxu0 %v669
    %764 = vmatpush1.msra.mxu0 %v668
    %765 = vmatprep.subr.mxu0 %v666
    %766 = vmatpush1.msra.mxu0 %v665
    %767 = vmatprep.subr.mxu0 %v663
    %768 = vmatpush1.msra.mxu0 %v662
    %769 = vmatprep.subr.mxu0 %v660
    %770 = vmatpush1.msra.mxu0 %v659
    %771 = vmatprep.subr.mxu0 0.0
    %772 = vmatpush2.msra.mxu0 0.0
    %773 = vmatprep.subr.mxu0 0.0
    %774 = vmatpush2.msra.mxu0 0.0
    %775 = vmatprep.subr.mxu0 0.0
    %776 = vmatpush2.msra.mxu0 0.0
    %777 = vmatprep.subr.mxu0 0.0
    %778 = vmatpush2.msra.mxu0 0.0
    %779 = vmatprep.subr.mxu0 0.0
    %780 = vmatpush2.msra.mxu0 0.0
    %781 = vmatprep.subr.mxu0 0.0
    %782 = vmatpush2.msra.mxu0 0.0
    %783 = vmatprep.subr.mxu0 0.0
    %784 = vmatpush2.msra.mxu0 0.0
    %785 = vmatprep.subr.mxu0 0.0
    %786 = vmatpush2.msra.mxu0 0.0
    %787 = vmatprep.subr.mxu0 0.0
    %788 = vmatpush2.msra.mxu0 0.0
    %789 = vmatprep.subr.mxu0 0.0
    %790 = vmatpush2.msra.mxu0 0.0
    %791 = vmatprep.subr.mxu0 0.0
    %792 = vmatpush2.msra.mxu0 0.0
    %793 = vmatprep.subr.mxu0 0.0
    %794 = vmatpush2.msra.mxu0 0.0
    %795 = vmatprep.subr.mxu0 0.0
    %796 = vmatpush2.msra.mxu0 0.0
    %797 = vmatprep.subr.mxu0 0.0
    %798 = vmatpush2.msra.mxu0 0.0
    %799 = vmatprep.subr.mxu0 0.0
    %800 = vmatpush2.msra.mxu0 0.0
    %801 = vmatprep.subr.mxu0 0.0
    %802 = vmatpush2.msra.mxu0 0.0
    %803 = vmatprep.mubr.f32.mxu0 0.0
    %804 = vmatmul.mubr.f32.gmra.mxu0 %v734
    %v805 = vpop.f32.mrf.mxu0
    %v806 = vadd.f32 0.0, %v805
    %v807 = vpop.f32.mrf.mxu0
    %v808 = vadd.f32 0.0, %v807
    %809 = vmatprep.mubr.f32.mxu0 0.0
    %810 = vmatmul.mubr.f32.gmra.mxu0 %v737
    %v811 = vpop.f32.mrf.mxu0
    %v812 = vadd.f32 0.0, %v811
    %v813 = vpop.f32.mrf.mxu0
    %v814 = vadd.f32 0.0, %v813
    %815 = vdwg.mxu0
    %816 = vmatprep.subr.mxu0 0.0
    %817 = vmatpush1.msra.mxu0 0.0
    %818 = vmatprep.subr.mxu0 0.0
    %819 = vmatpush1.msra.mxu0 0.0
    %820 = vmatprep.subr.mxu0 0.0
    %821 = vmatpush1.msra.mxu0 0.0
    %822 = vmatprep.subr.mxu0 0.0
    %823 = vmatpush1.msra.mxu0 0.0
    %824 = vmatprep.subr.mxu0 0.0
    %825 = vmatpush1.msra.mxu0 0.0
    %826 = vmatprep.subr.mxu0 0.0
    %827 = vmatpush1.msra.mxu0 0.0
    %828 = vmatprep.subr.mxu0 0.0
    %829 = vmatpush1.msra.mxu0 0.0
    %830 = vmatprep.subr.mxu0 0.0
    %831 = vmatpush1.msra.mxu0 0.0
    %832 = vmatprep.subr.mxu0 0.0
    %833 = vmatpush1.msra.mxu0 %v682
    %834 = vmatprep.subr.mxu0 0.0
    %835 = vmatpush1.msra.mxu0 %v679
    %836 = vmatprep.subr.mxu0 0.0
    %837 = vmatpush1.msra.mxu0 %v676
    %838 = vmatprep.subr.mxu0 0.0
    %839 = vmatpush1.msra.mxu0 %v673
    %840 = vmatprep.subr.mxu0 0.0
    %841 = vmatpush1.msra.mxu0 %v670
    %842 = vmatprep.subr.mxu0 0.0
    %843 = vmatpush1.msra.mxu0 %v667
    %844 = vmatprep.subr.mxu0 0.0
    %845 = vmatpush1.msra.mxu0 %v664
    %846 = vmatprep.subr.mxu0 0.0
    %847 = vmatpush1.msra.mxu0 %v661
    %848 = vmatprep.subr.mxu0 0.0
    %849 = vmatpush2.msra.mxu0 0.0
    %850 = vmatprep.subr.mxu0 0.0
    %851 = vmatpush2.msra.mxu0 0.0
    %852 = vmatprep.subr.mxu0 0.0
    %853 = vmatpush2.msra.mxu0 0.0
    %854 = vmatprep.subr.mxu0 0.0
    %855 = vmatpush2.msra.mxu0 0.0
    %856 = vmatprep.subr.mxu0 0.0
    %857 = vmatpush2.msra.mxu0 0.0
    %858 = vmatprep.subr.mxu0 0.0
    %859 = vmatpush2.msra.mxu0 0.0
    %860 = vmatprep.subr.mxu0 0.0
    %861 = vmatpush2.msra.mxu0 0.0
    %862 = vmatprep.subr.mxu0 0.0
    %863 = vmatpush2.msra.mxu0 0.0
    %864 = vmatprep.subr.mxu0 0.0
    %865 = vmatpush2.msra.mxu0 0.0
    %866 = vmatprep.subr.mxu0 0.0
    %867 = vmatpush2.msra.mxu0 0.0
    %868 = vmatprep.subr.mxu0 0.0
    %869 = vmatpush2.msra.mxu0 0.0
    %870 = vmatprep.subr.mxu0 0.0
    %871 = vmatpush2.msra.mxu0 0.0
    %872 = vmatprep.subr.mxu0 0.0
    %873 = vmatpush2.msra.mxu0 0.0
    %874 = vmatprep.subr.mxu0 0.0
    %875 = vmatpush2.msra.mxu0 0.0
    %876 = vmatprep.subr.mxu0 0.0
    %877 = vmatpush2.msra.mxu0 0.0
    %878 = vmatprep.subr.mxu0 0.0
    %879 = vmatpush2.msra.mxu0 0.0
    %880 = vmatprep.mubr.f32.mxu0 0.0
    %881 = vmatmul.mubr.f32.gmra.mxu0 %v734
    %v882 = vpop.f32.mrf.mxu0
    %v883 = vadd.f32 0.0, %v882
    %v884 = vpop.f32.mrf.mxu0
    %885 = vmatprep.mubr.f32.mxu0 0.0
    %886 = vmatmul.mubr.f32.gmra.mxu0 %v737
    %v887 = vpop.f32.mrf.mxu0
    %v888 = vadd.f32 0.0, %v887
    %v889 = vpop.f32.mrf.mxu0
    %890 = vdwg.mxu0
    %v892 = vsel %vm732, %v275, 0
    %v895 = vsel %vm732, %v276, 0
    %897 = vmatprep.subr.mxu0 0.0
    %898 = vmatpush1.msra.mxu0 0.0
    %899 = vmatprep.subr.mxu0 0.0
    %900 = vmatpush1.msra.mxu0 0.0
    %901 = vmatprep.subr.mxu0 0.0
    %902 = vmatpush1.msra.mxu0 0.0
    %903 = vmatprep.subr.mxu0 0.0
    %904 = vmatpush1.msra.mxu0 0.0
    %905 = vmatprep.subr.mxu0 0.0
    %906 = vmatpush1.msra.mxu0 0.0
    %907 = vmatprep.subr.mxu0 0.0
    %908 = vmatpush1.msra.mxu0 0.0
    %909 = vmatprep.subr.mxu0 0.0
    %910 = vmatpush1.msra.mxu0 0.0
    %911 = vmatprep.subr.mxu0 0.0
    %912 = vmatpush1.msra.mxu0 0.0
    %913 = vmatprep.subr.mxu0 %v657
    %914 = vmatpush1.msra.mxu0 %v656
    %915 = vmatprep.subr.mxu0 %v654
    %916 = vmatpush1.msra.mxu0 %v653
    %917 = vmatprep.subr.mxu0 %v651
    %918 = vmatpush1.msra.mxu0 %v650
    %919 = vmatprep.subr.mxu0 %v648
    %920 = vmatpush1.msra.mxu0 %v647
    %921 = vmatprep.subr.mxu0 %v645
    %922 = vmatpush1.msra.mxu0 %v644
    %923 = vmatprep.subr.mxu0 %v642
    %924 = vmatpush1.msra.mxu0 %v641
    %925 = vmatprep.subr.mxu0 %v639
    %926 = vmatpush1.msra.mxu0 %v638
    %927 = vmatprep.subr.mxu0 %v636
    %928 = vmatpush1.msra.mxu0 %v635
    %929 = vmatprep.subr.mxu0 0.0
    %930 = vmatpush2.msra.mxu0 0.0
    %931 = vmatprep.subr.mxu0 0.0
    %932 = vmatpush2.msra.mxu0 0.0
    %933 = vmatprep.subr.mxu0 0.0
    %934 = vmatpush2.msra.mxu0 0.0
    %935 = vmatprep.subr.mxu0 0.0
    %936 = vmatpush2.msra.mxu0 0.0
    %937 = vmatprep.subr.mxu0 0.0
    %938 = vmatpush2.msra.mxu0 0.0
    %939 = vmatprep.subr.mxu0 0.0
    %940 = vmatpush2.msra.mxu0 0.0
    %941 = vmatprep.subr.mxu0 0.0
    %942 = vmatpush2.msra.mxu0 0.0
    %943 = vmatprep.subr.mxu0 0.0
    %944 = vmatpush2.msra.mxu0 0.0
    %945 = vmatprep.subr.mxu0 0.0
    %946 = vmatpush2.msra.mxu0 0.0
    %947 = vmatprep.subr.mxu0 0.0
    %948 = vmatpush2.msra.mxu0 0.0
    %949 = vmatprep.subr.mxu0 0.0
    %950 = vmatpush2.msra.mxu0 0.0
    %951 = vmatprep.subr.mxu0 0.0
    %952 = vmatpush2.msra.mxu0 0.0
    %953 = vmatprep.subr.mxu0 0.0
    %954 = vmatpush2.msra.mxu0 0.0
    %955 = vmatprep.subr.mxu0 0.0
    %956 = vmatpush2.msra.mxu0 0.0
    %957 = vmatprep.subr.mxu0 0.0
    %958 = vmatpush2.msra.mxu0 0.0
    %959 = vmatprep.subr.mxu0 0.0
    %960 = vmatpush2.msra.mxu0 0.0
    %961 = vmatprep.mubr.f32.mxu0 0.0
    %962 = vmatmul.mubr.f32.gmra.mxu0 %v892
    %v963 = vpop.f32.mrf.mxu0
    %v964 = vadd.f32 %v806, %v963
    %v965 = vpop.f32.mrf.mxu0
    %v966 = vadd.f32 %v808, %v965
    %967 = vmatprep.mubr.f32.mxu0 0.0
    %968 = vmatmul.mubr.f32.gmra.mxu0 %v895
    %v969 = vpop.f32.mrf.mxu0
    %v970 = vadd.f32 %v812, %v969
    %v971 = vpop.f32.mrf.mxu0
    %v972 = vadd.f32 %v814, %v971
    %973 = vdwg.mxu0
    %974 = vmatprep.subr.mxu0 0.0
    %975 = vmatpush1.msra.mxu0 0.0
    %976 = vmatprep.subr.mxu0 0.0
    %977 = vmatpush1.msra.mxu0 0.0
    %978 = vmatprep.subr.mxu0 0.0
    %979 = vmatpush1.msra.mxu0 0.0
    %980 = vmatprep.subr.mxu0 0.0
    %981 = vmatpush1.msra.mxu0 0.0
    %982 = vmatprep.subr.mxu0 0.0
    %983 = vmatpush1.msra.mxu0 0.0
    %984 = vmatprep.subr.mxu0 0.0
    %985 = vmatpush1.msra.mxu0 0.0
    %986 = vmatprep.subr.mxu0 0.0
    %987 = vmatpush1.msra.mxu0 0.0
    %988 = vmatprep.subr.mxu0 0.0
    %989 = vmatpush1.msra.mxu0 0.0
    %990 = vmatprep.subr.mxu0 0.0
    %991 = vmatpush1.msra.mxu0 %v658
    %992 = vmatprep.subr.mxu0 0.0
    %993 = vmatpush1.msra.mxu0 %v655
    %994 = vmatprep.subr.mxu0 0.0
    %995 = vmatpush1.msra.mxu0 %v652
    %996 = vmatprep.subr.mxu0 0.0
    %997 = vmatpush1.msra.mxu0 %v649
    %998 = vmatprep.subr.mxu0 0.0
    %999 = vmatpush1.msra.mxu0 %v646
    %1000 = vmatprep.subr.mxu0 0.0
    %1001 = vmatpush1.msra.mxu0 %v643
    %1002 = vmatprep.subr.mxu0 0.0
    %1003 = vmatpush1.msra.mxu0 %v640
    %1004 = vmatprep.subr.mxu0 0.0
    %1005 = vmatpush1.msra.mxu0 %v637
    %1006 = vmatprep.subr.mxu0 0.0
    %1007 = vmatpush2.msra.mxu0 0.0
    %1008 = vmatprep.subr.mxu0 0.0
    %1009 = vmatpush2.msra.mxu0 0.0
    %1010 = vmatprep.subr.mxu0 0.0
    %1011 = vmatpush2.msra.mxu0 0.0
    %1012 = vmatprep.subr.mxu0 0.0
    %1013 = vmatpush2.msra.mxu0 0.0
    %1014 = vmatprep.subr.mxu0 0.0
    %1015 = vmatpush2.msra.mxu0 0.0
    %1016 = vmatprep.subr.mxu0 0.0
    %1017 = vmatpush2.msra.mxu0 0.0
    %1018 = vmatprep.subr.mxu0 0.0
    %1019 = vmatpush2.msra.mxu0 0.0
    %1020 = vmatprep.subr.mxu0 0.0
    %1021 = vmatpush2.msra.mxu0 0.0
    %1022 = vmatprep.subr.mxu0 0.0
    %1023 = vmatpush2.msra.mxu0 0.0
    %1024 = vmatprep.subr.mxu0 0.0
    %1025 = vmatpush2.msra.mxu0 0.0
    %1026 = vmatprep.subr.mxu0 0.0
    %1027 = vmatpush2.msra.mxu0 0.0
    %1028 = vmatprep.subr.mxu0 0.0
    %1029 = vmatpush2.msra.mxu0 0.0
    %1030 = vmatprep.subr.mxu0 0.0
    %1031 = vmatpush2.msra.mxu0 0.0
    %1032 = vmatprep.subr.mxu0 0.0
    %1033 = vmatpush2.msra.mxu0 0.0
    %1034 = vmatprep.subr.mxu0 0.0
    %1035 = vmatpush2.msra.mxu0 0.0
    %1036 = vmatprep.subr.mxu0 0.0
    %1037 = vmatpush2.msra.mxu0 0.0
    %1038 = vmatprep.mubr.f32.mxu0 0.0
    %1039 = vmatmul.mubr.f32.gmra.mxu0 %v892
    %v1040 = vpop.f32.mrf.mxu0
    %v1041 = vadd.f32 %v883, %v1040
    %v1042 = vpop.f32.mrf.mxu0
    %1043 = vmatprep.mubr.f32.mxu0 0.0
    %1044 = vmatmul.mubr.f32.gmra.mxu0 %v895
    %v1045 = vpop.f32.mrf.mxu0
    %v1046 = vadd.f32 %v888, %v1045
    %v1047 = vpop.f32.mrf.mxu0
    %1048 = vdwg.mxu0
    %v1050 = vsel %vm732, %v633, 0
    %v1053 = vsel %vm732, %v634, 0
    %1055 = vmatprep.subr.mxu0 0.0
    %1056 = vmatpush1.msra.mxu0 0.0
    %1057 = vmatprep.subr.mxu0 0.0
    %1058 = vmatpush1.msra.mxu0 0.0
    %1059 = vmatprep.subr.mxu0 0.0
    %1060 = vmatpush1.msra.mxu0 0.0
    %1061 = vmatprep.subr.mxu0 0.0
    %1062 = vmatpush1.msra.mxu0 0.0
    %1063 = vmatprep.subr.mxu0 0.0
    %1064 = vmatpush1.msra.mxu0 0.0
    %1065 = vmatprep.subr.mxu0 0.0
    %1066 = vmatpush1.msra.mxu0 0.0
    %1067 = vmatprep.subr.mxu0 0.0
    %1068 = vmatpush1.msra.mxu0 0.0
    %1069 = vmatprep.subr.mxu0 0.0
    %1070 = vmatpush1.msra.mxu0 0.0
    %1071 = vmatprep.subr.mxu0 %v705
    %1072 = vmatpush1.msra.mxu0 %v704
    %1073 = vmatprep.subr.mxu0 %v702
    %1074 = vmatpush1.msra.mxu0 %v701
    %1075 = vmatprep.subr.mxu0 %v699
    %1076 = vmatpush1.msra.mxu0 %v698
    %1077 = vmatprep.subr.mxu0 %v696
    %1078 = vmatpush1.msra.mxu0 %v695
    %1079 = vmatprep.subr.mxu0 %v693
    %1080 = vmatpush1.msra.mxu0 %v692
    %1081 = vmatprep.subr.mxu0 %v690
    %1082 = vmatpush1.msra.mxu0 %v689
    %1083 = vmatprep.subr.mxu0 %v687
    %1084 = vmatpush1.msra.mxu0 %v686
    %1085 = vmatprep.subr.mxu0 %v684
    %1086 = vmatpush1.msra.mxu0 %v683
    %1087 = vmatprep.subr.mxu0 0.0
    %1088 = vmatpush2.msra.mxu0 0.0
    %1089 = vmatprep.subr.mxu0 0.0
    %1090 = vmatpush2.msra.mxu0 0.0
    %1091 = vmatprep.subr.mxu0 0.0
    %1092 = vmatpush2.msra.mxu0 0.0
    %1093 = vmatprep.subr.mxu0 0.0
    %1094 = vmatpush2.msra.mxu0 0.0
    %1095 = vmatprep.subr.mxu0 0.0
    %1096 = vmatpush2.msra.mxu0 0.0
    %1097 = vmatprep.subr.mxu0 0.0
    %1098 = vmatpush2.msra.mxu0 0.0
    %1099 = vmatprep.subr.mxu0 0.0
    %1100 = vmatpush2.msra.mxu0 0.0
    %1101 = vmatprep.subr.mxu0 0.0
    %1102 = vmatpush2.msra.mxu0 0.0
    %1103 = vmatprep.subr.mxu0 0.0
    %1104 = vmatpush2.msra.mxu0 0.0
    %1105 = vmatprep.subr.mxu0 0.0
    %1106 = vmatpush2.msra.mxu0 0.0
    %1107 = vmatprep.subr.mxu0 0.0
    %1108 = vmatpush2.msra.mxu0 0.0
    %1109 = vmatprep.subr.mxu0 0.0
    %1110 = vmatpush2.msra.mxu0 0.0
    %1111 = vmatprep.subr.mxu0 0.0
    %1112 = vmatpush2.msra.mxu0 0.0
    %1113 = vmatprep.subr.mxu0 0.0
    %1114 = vmatpush2.msra.mxu0 0.0
    %1115 = vmatprep.subr.mxu0 0.0
    %1116 = vmatpush2.msra.mxu0 0.0
    %1117 = vmatprep.subr.mxu0 0.0
    %1118 = vmatpush2.msra.mxu0 0.0
    %1119 = vmatprep.mubr.f32.mxu0 0.0
    %1120 = vmatmul.mubr.f32.gmra.mxu0 %v1050
    %v1121 = vpop.f32.mrf.mxu0
    %v1122 = vadd.f32 0.0, %v1121
    %v1123 = vpop.f32.mrf.mxu0
    %v1124 = vadd.f32 0.0, %v1123
    %1125 = vmatprep.mubr.f32.mxu0 0.0
    %1126 = vmatmul.mubr.f32.gmra.mxu0 %v1053
    %v1127 = vpop.f32.mrf.mxu0
    %v1128 = vadd.f32 0.0, %v1127
    %v1129 = vpop.f32.mrf.mxu0
    %v1130 = vadd.f32 0.0, %v1129
    %1131 = vdwg.mxu0
    %1132 = vmatprep.subr.mxu0 0.0
    %1133 = vmatpush1.msra.mxu0 0.0
    %1134 = vmatprep.subr.mxu0 0.0
    %1135 = vmatpush1.msra.mxu0 0.0
    %1136 = vmatprep.subr.mxu0 0.0
    %1137 = vmatpush1.msra.mxu0 0.0
    %1138 = vmatprep.subr.mxu0 0.0
    %1139 = vmatpush1.msra.mxu0 0.0
    %1140 = vmatprep.subr.mxu0 0.0
    %1141 = vmatpush1.msra.mxu0 0.0
    %1142 = vmatprep.subr.mxu0 0.0
    %1143 = vmatpush1.msra.mxu0 0.0
    %1144 = vmatprep.subr.mxu0 0.0
    %1145 = vmatpush1.msra.mxu0 0.0
    %1146 = vmatprep.subr.mxu0 0.0
    %1147 = vmatpush1.msra.mxu0 0.0
    %1148 = vmatprep.subr.mxu0 0.0
    %1149 = vmatpush1.msra.mxu0 %v706
    %1150 = vmatprep.subr.mxu0 0.0
    %1151 = vmatpush1.msra.mxu0 %v703
    %1152 = vmatprep.subr.mxu0 0.0
    %1153 = vmatpush1.msra.mxu0 %v700
    %1154 = vmatprep.subr.mxu0 0.0
    %1155 = vmatpush1.msra.mxu0 %v697
    %1156 = vmatprep.subr.mxu0 0.0
    %1157 = vmatpush1.msra.mxu0 %v694
    %1158 = vmatprep.subr.mxu0 0.0
    %1159 = vmatpush1.msra.mxu0 %v691
    %1160 = vmatprep.subr.mxu0 0.0
    %1161 = vmatpush1.msra.mxu0 %v688
    %1162 = vmatprep.subr.mxu0 0.0
    %1163 = vmatpush1.msra.mxu0 %v685
    %1164 = vmatprep.subr.mxu0 0.0
    %1165 = vmatpush2.msra.mxu0 0.0
    %1166 = vmatprep.subr.mxu0 0.0
    %1167 = vmatpush2.msra.mxu0 0.0
    %1168 = vmatprep.subr.mxu0 0.0
    %1169 = vmatpush2.msra.mxu0 0.0
    %1170 = vmatprep.subr.mxu0 0.0
    %1171 = vmatpush2.msra.mxu0 0.0
    %1172 = vmatprep.subr.mxu0 0.0
    %1173 = vmatpush2.msra.mxu0 0.0
    %1174 = vmatprep.subr.mxu0 0.0
    %1175 = vmatpush2.msra.mxu0 0.0
    %1176 = vmatprep.subr.mxu0 0.0
    %1177 = vmatpush2.msra.mxu0 0.0
    %1178 = vmatprep.subr.mxu0 0.0
    %1179 = vmatpush2.msra.mxu0 0.0
    %1180 = vmatprep.subr.mxu0 0.0
    %1181 = vmatpush2.msra.mxu0 0.0
    %1182 = vmatprep.subr.mxu0 0.0
    %1183 = vmatpush2.msra.mxu0 0.0
    %1184 = vmatprep.subr.mxu0 0.0
    %1185 = vmatpush2.msra.mxu0 0.0
    %1186 = vmatprep.subr.mxu0 0.0
    %1187 = vmatpush2.msra.mxu0 0.0
    %1188 = vmatprep.subr.mxu0 0.0
    %1189 = vmatpush2.msra.mxu0 0.0
    %1190 = vmatprep.subr.mxu0 0.0
    %1191 = vmatpush2.msra.mxu0 0.0
    %1192 = vmatprep.subr.mxu0 0.0
    %1193 = vmatpush2.msra.mxu0 0.0
    %1194 = vmatprep.subr.mxu0 0.0
    %1195 = vmatpush2.msra.mxu0 0.0
    %1196 = vmatprep.mubr.f32.mxu0 0.0
    %1197 = vmatmul.mubr.f32.gmra.mxu0 %v1050
    %v1198 = vpop.f32.mrf.mxu0
    %v1199 = vadd.f32 0.0, %v1198
    %v1200 = vpop.f32.mrf.mxu0
    %1201 = vmatprep.mubr.f32.mxu0 0.0
    %1202 = vmatmul.mubr.f32.gmra.mxu0 %v1053
    %v1203 = vpop.f32.mrf.mxu0
    %v1204 = vadd.f32 0.0, %v1203
    %v1205 = vpop.f32.mrf.mxu0
    %1206 = vdwg.mxu0
    %v1207 = vadd.f32 %v964, %v1122
    %v1208 = vadd.f32 %v966, %v1124
    %v1209 = vadd.f32 %v1041, %v1199
    %v1210 = vadd.f32 %v970, %v1128
    %v1211 = vadd.f32 %v972, %v1130
    %v1212 = vadd.f32 %v1046, %v1204
    %v1214 = vsel %vm732, %v293, 0
    %v1217 = vsel %vm732, %v300, 0
    %1219 = vmatprep.subr.mxu0 0.0
    %1220 = vmatpush1.msra.mxu0 0.0
    %1221 = vmatprep.subr.mxu0 0.0
    %1222 = vmatpush1.msra.mxu0 0.0
    %1223 = vmatprep.subr.mxu0 0.0
    %1224 = vmatpush1.msra.mxu0 0.0
    %1225 = vmatprep.subr.mxu0 0.0
    %1226 = vmatpush1.msra.mxu0 0.0
    %1227 = vmatprep.subr.mxu0 0.0
    %1228 = vmatpush1.msra.mxu0 0.0
    %1229 = vmatprep.subr.mxu0 0.0
    %1230 = vmatpush1.msra.mxu0 0.0
    %1231 = vmatprep.subr.mxu0 0.0
    %1232 = vmatpush1.msra.mxu0 0.0
    %1233 = vmatprep.subr.mxu0 0.0
    %1234 = vmatpush1.msra.mxu0 0.0
    %1235 = vmatprep.subr.mxu0 %v729
    %1236 = vmatpush1.msra.mxu0 %v728
    %1237 = vmatprep.subr.mxu0 %v726
    %1238 = vmatpush1.msra.mxu0 %v725
    %1239 = vmatprep.subr.mxu0 %v723
    %1240 = vmatpush1.msra.mxu0 %v722
    %1241 = vmatprep.subr.mxu0 %v720
    %1242 = vmatpush1.msra.mxu0 %v719
    %1243 = vmatprep.subr.mxu0 %v717
    %1244 = vmatpush1.msra.mxu0 %v716
    %1245 = vmatprep.subr.mxu0 %v714
    %1246 = vmatpush1.msra.mxu0 %v713
    %1247 = vmatprep.subr.mxu0 %v711
    %1248 = vmatpush1.msra.mxu0 %v710
    %1249 = vmatprep.subr.mxu0 %v708
    %1250 = vmatpush1.msra.mxu0 %v707
    %1251 = vmatprep.subr.mxu0 0.0
    %1252 = vmatpush2.msra.mxu0 0.0
    %1253 = vmatprep.subr.mxu0 0.0
    %1254 = vmatpush2.msra.mxu0 0.0
    %1255 = vmatprep.subr.mxu0 0.0
    %1256 = vmatpush2.msra.mxu0 0.0
    %1257 = vmatprep.subr.mxu0 0.0
    %1258 = vmatpush2.msra.mxu0 0.0
    %1259 = vmatprep.subr.mxu0 0.0
    %1260 = vmatpush2.msra.mxu0 0.0
    %1261 = vmatprep.subr.mxu0 0.0
    %1262 = vmatpush2.msra.mxu0 0.0
    %1263 = vmatprep.subr.mxu0 0.0
    %1264 = vmatpush2.msra.mxu0 0.0
    %1265 = vmatprep.subr.mxu0 0.0
    %1266 = vmatpush2.msra.mxu0 0.0
    %1267 = vmatprep.subr.mxu0 0.0
    %1268 = vmatpush2.msra.mxu0 0.0
    %1269 = vmatprep.subr.mxu0 0.0
    %1270 = vmatpush2.msra.mxu0 0.0
    %1271 = vmatprep.subr.mxu0 0.0
    %1272 = vmatpush2.msra.mxu0 0.0
    %1273 = vmatprep.subr.mxu0 0.0
    %1274 = vmatpush2.msra.mxu0 0.0
    %1275 = vmatprep.subr.mxu0 0.0
    %1276 = vmatpush2.msra.mxu0 0.0
    %1277 = vmatprep.subr.mxu0 0.0
    %1278 = vmatpush2.msra.mxu0 0.0
    %1279 = vmatprep.subr.mxu0 0.0
    %1280 = vmatpush2.msra.mxu0 0.0
    %1281 = vmatprep.subr.mxu0 0.0
    %1282 = vmatpush2.msra.mxu0 0.0
    %1283 = vmatprep.mubr.f32.mxu0 0.0
    %1284 = vmatmul.mubr.f32.gmra.mxu0 %v1214
    %v1285 = vpop.f32.mrf.mxu0
    %v1286 = vadd.f32 0.0, %v1285
    %v1287 = vpop.f32.mrf.mxu0
    %v1288 = vadd.f32 0.0, %v1287
    %1289 = vmatprep.mubr.f32.mxu0 0.0
    %1290 = vmatmul.mubr.f32.gmra.mxu0 %v1217
    %v1291 = vpop.f32.mrf.mxu0
    %v1292 = vadd.f32 0.0, %v1291
    %v1293 = vpop.f32.mrf.mxu0
    %v1294 = vadd.f32 0.0, %v1293
    %1295 = vdwg.mxu0
    %1296 = vmatprep.subr.mxu0 0.0
    %1297 = vmatpush1.msra.mxu0 0.0
    %1298 = vmatprep.subr.mxu0 0.0
    %1299 = vmatpush1.msra.mxu0 0.0
    %1300 = vmatprep.subr.mxu0 0.0
    %1301 = vmatpush1.msra.mxu0 0.0
    %1302 = vmatprep.subr.mxu0 0.0
    %1303 = vmatpush1.msra.mxu0 0.0
    %1304 = vmatprep.subr.mxu0 0.0
    %1305 = vmatpush1.msra.mxu0 0.0
    %1306 = vmatprep.subr.mxu0 0.0
    %1307 = vmatpush1.msra.mxu0 0.0
    %1308 = vmatprep.subr.mxu0 0.0
    %1309 = vmatpush1.msra.mxu0 0.0
    %1310 = vmatprep.subr.mxu0 0.0
    %1311 = vmatpush1.msra.mxu0 0.0
    %1312 = vmatprep.subr.mxu0 0.0
    %1313 = vmatpush1.msra.mxu0 %v730
    %1314 = vmatprep.subr.mxu0 0.0
    %1315 = vmatpush1.msra.mxu0 %v727
    %1316 = vmatprep.subr.mxu0 0.0
    %1317 = vmatpush1.msra.mxu0 %v724
    %1318 = vmatprep.subr.mxu0 0.0
    %1319 = vmatpush1.msra.mxu0 %v721
    %1320 = vmatprep.subr.mxu0 0.0
    %1321 = vmatpush1.msra.mxu0 %v718
    %1322 = vmatprep.subr.mxu0 0.0
    %1323 = vmatpush1.msra.mxu0 %v715
    %1324 = vmatprep.subr.mxu0 0.0
    %1325 = vmatpush1.msra.mxu0 %v712
    %1326 = vmatprep.subr.mxu0 0.0
    %1327 = vmatpush1.msra.mxu0 %v709
    %1328 = vmatprep.subr.mxu0 0.0
    %1329 = vmatpush2.msra.mxu0 0.0
    %1330 = vmatprep.subr.mxu0 0.0
    %1331 = vmatpush2.msra.mxu0 0.0
    %1332 = vmatprep.subr.mxu0 0.0
    %1333 = vmatpush2.msra.mxu0 0.0
    %1334 = vmatprep.subr.mxu0 0.0
    %1335 = vmatpush2.msra.mxu0 0.0
    %1336 = vmatprep.subr.mxu0 0.0
    %1337 = vmatpush2.msra.mxu0 0.0
    %1338 = vmatprep.subr.mxu0 0.0
    %1339 = vmatpush2.msra.mxu0 0.0
    %1340 = vmatprep.subr.mxu0 0.0
    %1341 = vmatpush2.msra.mxu0 0.0
    %1342 = vmatprep.subr.mxu0 0.0
    %1343 = vmatpush2.msra.mxu0 0.0
    %1344 = vmatprep.subr.mxu0 0.0
    %1345 = vmatpush2.msra.mxu0 0.0
    %1346 = vmatprep.subr.mxu0 0.0
    %1347 = vmatpush2.msra.mxu0 0.0
    %1348 = vmatprep.subr.mxu0 0.0
    %1349 = vmatpush2.msra.mxu0 0.0
    %1350 = vmatprep.subr.mxu0 0.0
    %1351 = vmatpush2.msra.mxu0 0.0
    %1352 = vmatprep.subr.mxu0 0.0
    %1353 = vmatpush2.msra.mxu0 0.0
    %1354 = vmatprep.subr.mxu0 0.0
    %1355 = vmatpush2.msra.mxu0 0.0
    %1356 = vmatprep.subr.mxu0 0.0
    %1357 = vmatpush2.msra.mxu0 0.0
    %1358 = vmatprep.subr.mxu0 0.0
    %1359 = vmatpush2.msra.mxu0 0.0
    %1360 = vmatprep.mubr.f32.mxu0 0.0
    %1361 = vmatmul.mubr.f32.gmra.mxu0 %v1214
    %v1362 = vpop.f32.mrf.mxu0
    %v1363 = vadd.f32 0.0, %v1362
    %v1364 = vpop.f32.mrf.mxu0
    %1365 = vmatprep.mubr.f32.mxu0 0.0
    %1366 = vmatmul.mubr.f32.gmra.mxu0 %v1217
    %v1367 = vpop.f32.mrf.mxu0
    %v1368 = vadd.f32 0.0, %v1367
    %v1369 = vpop.f32.mrf.mxu0
    %1370 = vdwg.mxu0
    %v1371 = vadd.f32 %v1207, %v1286
    %v1372 = vadd.f32 %v1208, %v1288
    %v1373 = vadd.f32 %v1209, %v1363
    %v1374 = vadd.f32 %v1210, %v1292
    %v1375 = vadd.f32 %v1211, %v1294
    %v1376 = vadd.f32 %v1212, %v1368
    %1377 = vset.pattern.permute.xlu0 1
    %1378 = vperm.xlu0 %1377, %v102
    %v1379 = vpop.permute.xlu0 %1378
    %1381 = vset.pattern.permute.xlu0 1
    %1382 = vperm.xlu0 %1381, %v103
    %v1383 = vpop.permute.xlu0 %1382
    %v1385 = vmul.f32 %v1379, %v1372
    %v1386 = vmul.f32 %v1383, %v1375
    %v1387 = vadd.f32 %v1371, %v1385
    %v1388 = vadd.f32 %v1374, %v1386
    %1389 = vset.pattern.permute.xlu0 2
    %1390 = vperm.xlu0 %1389, %v102
    %v1391 = vpop.permute.xlu0 %1390
    %1393 = vset.pattern.permute.xlu0 2
    %1394 = vperm.xlu0 %1393, %v103
    %v1395 = vpop.permute.xlu0 %1394
    %v1397 = vmul.f32 %v1391, %v1373
    %v1398 = vmul.f32 %v1395, %v1376
    %v1399 = vadd.f32 %v1387, %v1397
    %v1400 = vadd.f32 %v1388, %v1398
    %v1402 = vlaneseq
    %v1403 = vshrl.u32 %v1402, 7
    %v1404 = vsub.s32 0, %v1403
    %v1405 = vrot.slane %v731, %v1404
    %v1407 = vadd.f32 %v1399, %v1405
    %v1408 = vadd.f32 %v1400, %v1405
    %1409 = vst [vmem:[#allocation11] sm:$0xff] %v1407
    %1410 = vst [vmem:[#allocation11 + $0x8] sm:$0xff] %v1408
    // Predicated region
    $region54: #{tpu_custom_call.1} parent=1 // pred_check
      _
    $region55: #{tpu_custom_call.1} parent=1 // pred_check_branch
      %1412 = sbr.rel (0) target = $region57
    $region56: #{tpu_custom_call.1} parent=1 // pred_region
      %s1414 = ssub.s32 256, 256
      %1415 = vsyncadd [#allocation4], %s1414
      %s1416 = sshll.u32 [#allocation11], 4
      %s1417 = int_to_ptr.vmem [resolvable:$true] %s1416
      %1422 = dma.vmem_to_hbm [thread:$0]  %s1417, 256, %s8, [#allocation4], 128, 128, 8
    $region57: #{tpu_custom_call.1} parent=1 // pred_fallthru
      _
    // Predicated region
    $region58: #{tpu_custom_call.1} parent=1 // pred_check
      _
    $region59: #{tpu_custom_call.1} parent=1 // pred_check_branch
      %1424 = sbr.rel (0) target = $region61
    $region60: #{tpu_custom_call.1} parent=1 // pred_region
      %1425 = dma.done [#allocation4], 256
    $region61: #{tpu_custom_call.1} parent=1 // pred_fallthru
      _
    %1426 = vsyncpa [#allocation3], 1
    %1427 = vsyncpa [#allocation6], 1
    %1428 = vsyncpa [#allocation9], 1
    %1429 = vsyncpa [#allocation4], 1

</llo_original>
